<compile_context>
chip_gen: v6e
topology: v6e:2x2x1
jax: 0.10.0
libtpu: 0.0.40
codegen_flags: <defaults>
</compile_context>

<pallas_src>
import jax
import jax.numpy as jnp
from jax import lax
from jax.experimental import pallas as pl
from jax.experimental.pallas import tpu as pltpu

BN_EPS = 1e-5
MATMUL_DTYPE = jnp.bfloat16      # MXU operand dtype; accumulation / stats stay f32.


def _tpu_vmem_capacity_bytes():
    """Physical VMEM per core (generation-aware); conservative default if unknown."""
    try:
        cap = getattr(pltpu.get_tpu_info(), "vmem_capacity_bytes", None)
        if cap:
            return int(cap)
    except Exception:
        pass
    return 64 * 1024 * 1024      # v7x-sized fallback — safe on every generation


def _pick_tile_d(d, h, w, cin, cout, block_budget_bytes):
    """Largest divisor of d whose double-buffered (input + output) blocks fit the
    budget.  No unroll cap: the depth tile is just the matmul M dim, so bigger tiles
    only amortize per-step overhead and feed the MXU (target M = tile_d*H*W >= 256)."""
    k27 = 27 * cin
    pc = 8 * cout
    in_elt = 2 if MATMUL_DTYPE == jnp.bfloat16 else 4

    def fits(t):
        step = 2 * (t * h * w * k27 * in_elt + t * h * w * pc * 4)   # double-buffered
        fixed = k27 * pc * in_elt + 8 * pc * 4                        # weights + bias/stats
        return step + fixed <= block_budget_bytes

    best = None
    for t in range(1, d + 1):
        if d % t:
            continue
        if t != d and (t * h * w) % 8:   # keep the block's 2nd-minor dim sublane-aligned
            continue
        if fits(t):
            best = t
    if best is None:
        best = 1 if (h * w) % 8 == 0 else d
    return best


def _upconv_kernel(x_ref, w_ref, b_ref, y_ref, sum_ref, sq_ref):
    """One (batch, depth-tile) grid step of the fused x2-upsample + 3x3x3 conv + bias:

        x_ref  : (1, tile_d*H*W, 27*Cin)   bf16 im2col'd input tile
        w_ref  : (27*Cin, 8*Cout)          bf16 parity-combined weights
        b_ref  : (1, 8*Cout)               f32 conv bias tiled over the 8 parities
        y_ref  : (1, tile_d*H*W, 8*Cout)   f32 packed conv output tile
        sum_ref/sq_ref : (1, 1, 1, 8*Cout) f32 per-tile BatchNorm-stat partials
    """
    acc = jnp.dot(x_ref[0], w_ref[...], preferred_element_type=jnp.float32)
    acc = acc + b_ref[...]
    y_ref[0] = acc
    # Training-mode BatchNorm partials (per-tile; reduced in XLA afterwards).
    # TODO(synk): E[x^2]-E[x]^2 in f32 can cancel for huge N*D*H*W with large means; a
    # shifted / Welford-style accumulation would be safer in that regime.
    sum_ref[0, 0] = jnp.sum(acc, axis=0, keepdims=True)
    sq_ref[0, 0] = jnp.sum(acc * acc, axis=0, keepdims=True)


def up_conv3d_forward(x_ncdhw, w_oidhw, bias, gamma, beta):
    """Forward pass of up_conv3D.  x: (N, C_in, D, H, W) f32.
    Returns (N, C_out, 2D, 2H, 2W) f32 (PyTorch training-mode BatchNorm semantics)."""
    n, cin, d, h, w = x_ncdhw.shape
    cout = w_oidhw.shape[0]
    k27 = 27 * cin                 # matmul K: all 27 stencil taps folded
    pc = 8 * cout                  # matmul N: 8 parities x Cout

    # --------------- wrapper-side layout plumbing (original resolution) ---------------
    x = jnp.transpose(x_ncdhw, (0, 2, 3, 4, 1)).astype(MATMUL_DTYPE)       # NDHWC
    x_pad = jnp.pad(x, ((0, 0), (1, 1), (1, 1), (1, 1), (0, 0)))
    # im2col over all 27 taps -> K = 27*Cin (single matmul per tile, no depth halo).
    # TODO(synk): for large Cin the 27x fold triples the input HBM stream vs a 9x fold
    # plus a manual depth-halo DMA; pick the fold based on the conv's actual roofline.
    x27 = jnp.concatenate(
        [x_pad[:, a:a + d, b:b + h, c:c + w, :]
         for a in range(3) for b in range(3) for c in range(3)], axis=-1)
    x27 = x27.reshape(n, d * h * w, k27)

    # Parity-combined weights: tap a of the original signal contributes M[p, a, k]*w[k]
    # to output parity p (separably per spatial dimension).
    w_k = jnp.transpose(w_oidhw, (2, 3, 4, 1, 0)).astype(jnp.float32)      # (kd,kh,kw,Ci,Co)
    m = jnp.array([[[1, 0, 0], [0, 1, 1], [0, 0, 0]],
                   [[0, 0, 0], [1, 1, 0], [0, 0, 1]]], dtype=jnp.float32)  # (parity, tap, k)
    wp = jnp.einsum('pak,qbl,rcm,klmio->abcpqrio', m, m, m, w_k)
    # (tap_d,tap_h,tap_w,pd,ph,pw,Ci,Co) -> (27*Cin, 8*Cout): K=(a,b,c,ci), N=(pd,ph,pw,co)
    w_packed = jnp.transpose(wp, (0, 1, 2, 6, 3, 4, 5, 7)).reshape(k27, pc)
    w_packed = w_packed.astype(MATMUL_DTYPE)
    bias_p = jnp.tile(bias.astype(jnp.float32), 8).reshape(1, pc)

    # --------------- generation-aware tiling ------------------------------------------
    vmem_cap = _tpu_vmem_capacity_bytes()
    tile_d = _pick_tile_d(d, h, w, cin, cout, block_budget_bytes=vmem_cap // 2)
    n_dt = d // tile_d
    tile_m = tile_d * h * w
    grid = (n, n_dt)
    params = pltpu.CompilerParams(
        dimension_semantics=("parallel", "parallel"),
        vmem_limit_bytes=int(vmem_cap * 3 // 4))

    conv_out, psum, psq = pl.pallas_call(
        _upconv_kernel,
        out_shape=(
            jax.ShapeDtypeStruct((n, d * h * w, pc), jnp.float32),
            jax.ShapeDtypeStruct((n, n_dt, 1, pc), jnp.float32),
            jax.ShapeDtypeStruct((n, n_dt, 1, pc), jnp.float32),
        ),
        grid=grid,
        in_specs=[
            pl.BlockSpec((1, tile_m, k27), lambda i, t: (i, t, 0)),
            pl.BlockSpec((k27, pc), lambda i, t: (0, 0)),
            pl.BlockSpec((1, pc), lambda i, t: (0, 0)),
        ],
        out_specs=(
            pl.BlockSpec((1, tile_m, pc), lambda i, t: (i, t, 0)),
            pl.BlockSpec((1, 1, 1, pc), lambda i, t: (i, t, 0, 0)),
            pl.BlockSpec((1, 1, 1, pc), lambda i, t: (i, t, 0, 0)),
        ),
        compiler_params=params,
    )(x27, w_packed, bias_p)

    # --------- BatchNorm3d (training-mode) statistics from the per-tile partials ------
    count = jnp.float32(n * 8 * d * h * w)                    # N * 2D * 2H * 2W
    ch_sum = jnp.sum(psum, axis=(0, 1, 2)).reshape(8, cout).sum(axis=0)
    ch_sq = jnp.sum(psq, axis=(0, 1, 2)).reshape(8, cout).sum(axis=0)
    mean = ch_sum / count
    var = ch_sq / count - mean * mean                         # biased variance
    inv_std = lax.rsqrt(var + BN_EPS)
    scale_c = gamma.astype(jnp.float32) * inv_std             # (Cout,)
    shift_c = beta.astype(jnp.float32) - mean * scale_c       # (Cout,)

    # --------- epilogue: ONE fused XLA pass --------------------------------------------
    # BN affine + ReLU + parity un-interleave + NCDHW conversion.  XLA fuses the
    # elementwise math into the (unavoidable) permutation copy, so the largest tensor
    # is read and written exactly once here (vs Pallas-BN + XLA transpose = two passes).
    # TODO(synk): a Pallas epilogue writing NCDHW directly (in-kernel parity interleave
    # across lanes) would remove this XLA pass too, at the cost of cross-lane shuffles.
    y = conv_out.reshape(n, d, h, w, 2, 2, 2, cout)           # (..., pd, ph, pw, c)
    z = jnp.maximum(y * scale_c + shift_c, 0.0)
    z = jnp.transpose(z, (0, 7, 1, 4, 2, 5, 3, 6))            # (n, c, d, pd, h, ph, w, pw)
    return z.reshape(n, cout, 2 * d, 2 * h, 2 * w)            # NCDHW


def _reference(x_ncdhw, w_oidhw, bias, gamma, beta):
    """Pure-JAX f32 reference (matches PyTorch training-mode forward)."""
    x = jnp.transpose(x_ncdhw, (0, 2, 3, 4, 1))
    x = jnp.repeat(jnp.repeat(jnp.repeat(x, 2, axis=1), 2, axis=2), 2, axis=3)
    w_dhwio = jnp.transpose(w_oidhw, (2, 3, 4, 1, 0))
    y = lax.conv_general_dilated(
        x, w_dhwio, window_strides=(1, 1, 1), padding="SAME",
        dimension_numbers=("NDHWC", "DHWIO", "NDHWC")) + bias
    mean = y.mean(axis=(0, 1, 2, 3))
    var = ((y - mean) ** 2).mean(axis=(0, 1, 2, 3))
    z = (y - mean) / jnp.sqrt(var + BN_EPS) * gamma + beta
    z = jnp.maximum(z, 0.0)
    return jnp.transpose(z, (0, 4, 1, 2, 3))


if __name__ == "__main__":
    key = jax.random.PRNGKey(0)
    k_x, k_w, k_b = jax.random.split(key, 3)

    N, C_IN, C_OUT, D, H, W = 2, 4, 8, 8, 8, 8
    x = jax.random.normal(k_x, (N, C_IN, D, H, W), dtype=jnp.float32)
    # Conv3d(ch_in=4, ch_out=8, k=3) parameters, deterministic synthetic init.
    w = 0.1 * jax.random.normal(k_w, (C_OUT, C_IN, 3, 3, 3), dtype=jnp.float32)
    b = 0.1 * jax.random.normal(k_b, (C_OUT,), dtype=jnp.float32)
    # BatchNorm3d defaults: weight=1, bias=0.
    gamma = jnp.ones((C_OUT,), dtype=jnp.float32)
    beta = jnp.zeros((C_OUT,), dtype=jnp.float32)

    out = jax.jit(up_conv3d_forward)(x, w, b, gamma, beta)
    out = jax.block_until_ready(out)

    ref = _reference(x, w, b, gamma, beta)
    assert out.shape == (N, C_OUT, 2 * D, 2 * H, 2 * W)
    # bf16 MXU operands (f32 accumulation) -> slightly looser tolerance than pure f32.
    tol = 2e-2 if MATMUL_DTYPE == jnp.bfloat16 else 1e-3
    assert jnp.allclose(out, ref, atol=tol, rtol=tol), "mismatch vs reference"

    print("KERNEL_OK")
</pallas_src>

<mosaic_0001>
module attributes {stable_mosaic.version = 11 : i64} {
  func.func @_upconv_kernel(%arg0: i32, %arg1: i32, %arg2: memref<1x512x108xbf16, #tpu.memory_space<vmem>>, %arg3: memref<108x64xbf16, #tpu.memory_space<vmem>>, %arg4: memref<1x64xf32, #tpu.memory_space<vmem>>, %arg5: memref<1x512x64xf32, #tpu.memory_space<vmem>>, %arg6: memref<1x1x1x64xf32, #tpu.memory_space<vmem>>, %arg7: memref<1x1x1x64xf32, #tpu.memory_space<vmem>>) attributes {dimension_semantics = [#tpu.dimension_semantics<parallel>, #tpu.dimension_semantics<parallel>], iteration_bounds = array<i64: 2, 1>, scalar_prefetch = 0 : i64, scratch_operands = 0 : i64, tpu.core_type = #tpu.core_type<tc>, window_params = [{transform_indices = @transform_0, window_bounds = array<i64: 1, 512, 108>}, {pipeline_mode = #tpu.pipeline_mode<synchronous>, transform_indices = @transform_1, window_bounds = array<i64: 108, 64>}, {pipeline_mode = #tpu.pipeline_mode<synchronous>, transform_indices = @transform_2, window_bounds = array<i64: 1, 64>}, {transform_indices = @transform_3, window_bounds = array<i64: 1, 512, 64>}, {transform_indices = @transform_4, window_bounds = array<i64: 1, 1, 1, 64>}, {transform_indices = @transform_5, window_bounds = array<i64: 1, 1, 1, 64>}]} {
    %c0 = arith.constant 0 : index
    %c0_0 = arith.constant 0 : index
    %c0_1 = arith.constant 0 : index
    %0 = vector.load %arg2[%c0, %c0_0, %c0_1] : memref<1x512x108xbf16, #tpu.memory_space<vmem>>, vector<1x512x108xbf16>
    %1 = vector.shape_cast %0 : vector<1x512x108xbf16> to vector<512x108xbf16>
    %c0_2 = arith.constant 0 : index
    %c0_3 = arith.constant 0 : index
    %2 = vector.load %arg3[%c0_2, %c0_3] : memref<108x64xbf16, #tpu.memory_space<vmem>>, vector<108x64xbf16>
    %cst = arith.constant dense<0.000000e+00> : vector<512x64xf32>
    %3 = tpu.matmul %1, %2, %cst {dimension_numbers = #tpu.dot_dimension_numbers<[1], [0], [0], [1], [0, 0, 1, 1], [], []>} : vector<512x108xbf16>, vector<108x64xbf16>, vector<512x64xf32> -> vector<512x64xf32>
    %c0_4 = arith.constant 0 : index
    %c0_5 = arith.constant 0 : index
    %4 = vector.load %arg4[%c0_4, %c0_5] : memref<1x64xf32, #tpu.memory_space<vmem>>, vector<1x64xf32>
    %5 = vector.broadcast %4 : vector<1x64xf32> to vector<512x64xf32>
    %6 = arith.addf %3, %5 : vector<512x64xf32>
    %c0_6 = arith.constant 0 : index
    %c0_7 = arith.constant 0 : index
    %c0_8 = arith.constant 0 : index
    %7 = vector.load %arg5[%c0_6, %c0_7, %c0_8] : memref<1x512x64xf32, #tpu.memory_space<vmem>>, vector<1x512x64xf32>
    %8 = vector.shape_cast %7 : vector<1x512x64xf32> to vector<512x64xf32>
    %9 = vector.shape_cast %6 : vector<512x64xf32> to vector<1x512x64xf32>
    tpu.vector_store %arg5[%c0_6, %c0_7, %c0_8], %9 {strides = array<i32>} : memref<1x512x64xf32, #tpu.memory_space<vmem>>, vector<1x512x64xf32>,
    %cst_9 = arith.constant dense<0.000000e+00> : vector<64xf32>
    %10 = vector.multi_reduction <add>, %6, %cst_9 [0] : vector<512x64xf32> to vector<64xf32>
    %11 = vector.shape_cast %10 : vector<64xf32> to vector<1x64xf32>
    %c0_10 = arith.constant 0 : index
    %c0_11 = arith.constant 0 : index
    %c0_12 = arith.constant 0 : index
    %c0_13 = arith.constant 0 : index
    %12 = vector.load %arg6[%c0_10, %c0_11, %c0_12, %c0_13] : memref<1x1x1x64xf32, #tpu.memory_space<vmem>>, vector<1x1x1x64xf32>
    %13 = vector.shape_cast %12 : vector<1x1x1x64xf32> to vector<1x64xf32>
    %14 = vector.shape_cast %11 : vector<1x64xf32> to vector<1x1x1x64xf32>
    tpu.vector_store %arg6[%c0_10, %c0_11, %c0_12, %c0_13], %14 {strides = array<i32>} : memref<1x1x1x64xf32, #tpu.memory_space<vmem>>, vector<1x1x1x64xf32>,
    %15 = arith.mulf %6, %6 : vector<512x64xf32>
    %cst_14 = arith.constant dense<0.000000e+00> : vector<64xf32>
    %16 = vector.multi_reduction <add>, %15, %cst_14 [0] : vector<512x64xf32> to vector<64xf32>
    %17 = vector.shape_cast %16 : vector<64xf32> to vector<1x64xf32>
    %c0_15 = arith.constant 0 : index
    %c0_16 = arith.constant 0 : index
    %c0_17 = arith.constant 0 : index
    %c0_18 = arith.constant 0 : index
    %18 = vector.load %arg7[%c0_15, %c0_16, %c0_17, %c0_18] : memref<1x1x1x64xf32, #tpu.memory_space<vmem>>, vector<1x1x1x64xf32>
    %19 = vector.shape_cast %18 : vector<1x1x1x64xf32> to vector<1x64xf32>
    %20 = vector.shape_cast %17 : vector<1x64xf32> to vector<1x1x1x64xf32>
    tpu.vector_store %arg7[%c0_15, %c0_16, %c0_17, %c0_18], %20 {strides = array<i32>} : memref<1x1x1x64xf32, #tpu.memory_space<vmem>>, vector<1x1x1x64xf32>,
    return
  }
  func.func @transform_0(%arg0: i32, %arg1: i32) -> (i32, i32, i32) {
    %c0_i32 = arith.constant 0 : i32
    %c0_i32_0 = arith.constant 0 : i32
    return %arg0, %arg1, %c0_i32 : i32, i32, i32
  }
  func.func @transform_1(%arg0: i32, %arg1: i32) -> (i32, i32) {
    %c0_i32 = arith.constant 0 : i32
    %c0_i32_0 = arith.constant 0 : i32
    %c0_i32_1 = arith.constant 0 : i32
    return %c0_i32, %c0_i32_0 : i32, i32
  }
  func.func @transform_2(%arg0: i32, %arg1: i32) -> (i32, i32) {
    %c0_i32 = arith.constant 0 : i32
    %c0_i32_0 = arith.constant 0 : i32
    %c0_i32_1 = arith.constant 0 : i32
    return %c0_i32, %c0_i32_0 : i32, i32
  }
  func.func @transform_3(%arg0: i32, %arg1: i32) -> (i32, i32, i32) {
    %c0_i32 = arith.constant 0 : i32
    %c0_i32_0 = arith.constant 0 : i32
    return %arg0, %arg1, %c0_i32 : i32, i32, i32
  }
  func.func @transform_4(%arg0: i32, %arg1: i32) -> (i32, i32, i32, i32) {
    %c0_i32 = arith.constant 0 : i32
    %c0_i32_0 = arith.constant 0 : i32
    %c0_i32_1 = arith.constant 0 : i32
    return %arg0, %arg1, %c0_i32, %c0_i32_0 : i32, i32, i32, i32
  }
  func.func @transform_5(%arg0: i32, %arg1: i32) -> (i32, i32, i32, i32) {
    %c0_i32 = arith.constant 0 : i32
    %c0_i32_0 = arith.constant 0 : i32
    %c0_i32_1 = arith.constant 0 : i32
    return %arg0, %arg1, %c0_i32, %c0_i32_0 : i32, i32, i32, i32
  }
}

</mosaic_0001>

<llo_original>
// kernel: tile.9
$region0: #{tile.9}
  %s0 = inlined_call_operand.vmem [shape: f32[8,8], index: 0, kind: input, shape index: {}]
  %s1 = inlined_call_operand.vmem [shape: f32[1,64], index: 1, kind: output, shape index: {}]
  $region1: #{tile.9} parent=0
    #allocation0 [shape = 'u8[4096]{0}', space=vmem, size = 0x1000, scoped, tag = 'scoped mem for output reshape']
    %v2 = vld [vmem:[%s0] sm:$0x1]
    %vm3 = vcmask 64512
    %4 = vst.msk [vmem:[#allocation0] sm:$0x1] %vm3, %v2
    %s5 = scalar_lea.vmem %s0, 7
    %v6 = vld [vmem:[%s5] sm:$0x1]
    %7 = vrot.lane.b32.xlu0 %v6, 56
    %v8 = vpop.permute.xlu0 %7
    %vm9 = vcmask 523712
    %10 = vst.msk [vmem:[#allocation0] sm:$0x1] %vm9, %v8
    %s11 = scalar_lea.vmem %s0, 6
    %v12 = vld [vmem:[%s11] sm:$0x1]
    %13 = vrot.lane.b32.xlu0 %v12, 48
    %v14 = vpop.permute.xlu0 %13
    %vm15 = vcmask 458112
    %16 = vst.msk [vmem:[#allocation0] sm:$0x1] %vm15, %v14
    %s17 = scalar_lea.vmem %s0, 5
    %v18 = vld [vmem:[%s17] sm:$0x1]
    %19 = vrot.lane.b32.xlu0 %v18, 40
    %v20 = vpop.permute.xlu0 %19
    %vm21 = vcmask 392512
    %22 = vst.msk [vmem:[#allocation0] sm:$0x1] %vm21, %v20
    %s23 = scalar_lea.vmem %s0, 4
    %v24 = vld [vmem:[%s23] sm:$0x1]
    %25 = vrot.lane.b32.xlu0 %v24, 32
    %v26 = vpop.permute.xlu0 %25
    %vm27 = vcmask 326912
    %28 = vst.msk [vmem:[#allocation0] sm:$0x1] %vm27, %v26
    %s29 = scalar_lea.vmem %s0, 3
    %v30 = vld [vmem:[%s29] sm:$0x1]
    %31 = vrot.lane.b32.xlu0 %v30, 24
    %v32 = vpop.permute.xlu0 %31
    %vm33 = vcmask 261312
    %34 = vst.msk [vmem:[#allocation0] sm:$0x1] %vm33, %v32
    %s35 = scalar_lea.vmem %s0, 2
    %v36 = vld [vmem:[%s35] sm:$0x1]
    %37 = vrot.lane.b32.xlu0 %v36, 16
    %v38 = vpop.permute.xlu0 %37
    %vm39 = vcmask 195712
    %40 = vst.msk [vmem:[#allocation0] sm:$0x1] %vm39, %v38
    %s41 = scalar_lea.vmem %s0, 1
    %v42 = vld [vmem:[%s41] sm:$0x1]
    %43 = vrot.lane.b32.xlu0 %v42, 8
    %v44 = vpop.permute.xlu0 %43
    %vm45 = vcmask 130112
    %46 = vst.msk [vmem:[#allocation0] sm:$0x1] %vm45, %v44
    %s48 = sshll.u32 1, 1
    %s49 = ssub.s32 %s48, 1
    %v51 = vld [vmem:[#allocation0] sm:%s49]
    %s52 = sshll.u32 1, 1
    %s53 = ssub.s32 %s52, 1
    %54 = vst [vmem:[%s1] sm:%s53] %v51

// kernel: tile.8
$region0: #{tile.8}
  #allocation2 [shape = 's32[1]{0}', space=sflag, size = 0x4, scoped, tag = 'scoped memory for tile.8']
  %s0 = inlined_call_operand.hbm [shape: f32[8], index: 0, kind: input, shape index: {}]
  %s1 = inlined_call_operand.vmem [shape: f32[8,8], index: 1, kind: output, shape index: {}]
  $region1: #{tile.8} parent=0
    #allocation0 [shape = 'u8[512]{0}', space=vmem, size = 0x400, scoped, tag = 'operand span for operand 0']
    #allocation1 [shape = 's32[1]{0}', space=sflag, size = 0x4, scoped, tag = 'scoped memory for tile.8']
    %2 = vsyncpa [#allocation1], 0
    // Predicated region
    $region2: #{tile.8} parent=1 // pred_check
      _
    $region3: #{tile.8} parent=1 // pred_check_branch
      %4 = sbr.rel (0) target = $region5
    $region4: #{tile.8} parent=1 // pred_region
      %s6 = ssub.s32 16, 16
      %7 = vsyncadd [#allocation1], %s6
      %s9 = sshll.u32 [#allocation0], 4
      %s10 = int_to_ptr.vmem [resolvable:$true] %s9
      %12 = dma.hbm_to_vmem [thread:$0]  %s0, 16, %s10, [#allocation1]
    $region5: #{tile.8} parent=1 // pred_fallthru
      _
    // Predicated region
    $region6: #{tile.8} parent=1 // pred_check
      _
    $region7: #{tile.8} parent=1 // pred_check_branch
      %14 = sbr.rel (0) target = $region9
    $region8: #{tile.8} parent=1 // pred_region
      %15 = dma.done [#allocation1], 16
    $region9: #{tile.8} parent=1 // pred_fallthru
      _
    %v16 = vld [vmem:[#allocation0] ss:$0 sm:$0xff]
    %17 = vst [vmem:[%s1] sm:$0xff] %v16
    %18 = vsyncpa [#allocation1], 1

// kernel: up_conv3d_forward.1
$region0: #{up_conv3d_forward.1}
  #allocation0 [shape = 'u32[]', space=smem, size = 0x4, offset = 0x4, fixed_abs, tag = 'smem constant byte address 0x4 - core index']
  #allocation1 [shape = 'u32[144,128]{1,0:T(1,128)}', space=vmem, size = 0x12000, scoped, tag = 'internal scratch']
  %s0 = inlined_call_operand.vmem [shape: bf16[2,512,108], index: 0, kind: input, shape index: {}]
  %s1 = inlined_call_operand.vmem [shape: bf16[108,64], index: 1, kind: input, shape index: {}]
  %s2 = inlined_call_operand.vmem [shape: f32[1,64], index: 2, kind: input, shape index: {}]
  %s3 = inlined_call_operand.vmem [shape: f32[2,512,64], index: 3, kind: output, shape index: {0}]
  %s4 = inlined_call_operand.vmem [shape: f32[2,1,1,64], index: 4, kind: output, shape index: {1}]
  %s5 = inlined_call_operand.vmem [shape: f32[2,1,1,64], index: 5, kind: output, shape index: {2}]
  %6 = xla_tuple %s3, %s4, %s5
  %s7 = sld [smem:[#allocation0]]
  $region61: #{up_conv3d_forward.1} parent=0
    _
  %s9 = ssub.s32 1, %s7
  %s10 = scalar_select 0, %s9, %s7
  loop: start=0, step=1, limit=4
  $region2: #{up_conv3d_forward.1} parent=0 // loop_pre_header
    _
  $region3: #{up_conv3d_forward.1} parent=0 // loop_header
    %s12 = sphi 0, %s16
    %p13 = scmp.ge.s32.totalorder %s12, 4
    %s19 = sphi 0, %s31
    %s20 = sphi 0, %s27
    %s21 = sphi 0, %s19
    %s22 = sphi 0, %s20
    %s23 = sphi 0, %s21
    %s24 = sphi 0, %s22
    %s36 = sphi 0, %s38
    %s39 = sphi 0, %s36
    %s40 = sphi 0, %s39
    %s56 = sphi 0, %s40
    %s60 = sphi 0, %s60
    %s62 = sphi 0, %s60
    %s63 = sphi 0, %s62
    %s77 = sphi 0, %s63
    %s81 = sphi 0, %s81
    %s83 = sphi 0, %s81
    %s84 = sphi 0, %s83
    %s98 = sphi 0, %s84
    %s106 = sphi 0, %s108
    %s109 = sphi 0, %s106
    %s110 = sphi 0, %s109
    %s126 = sphi 0, %s110
    %s134 = sphi 0, %s136
    %s137 = sphi 0, %s134
    %s138 = sphi 0, %s137
    %s154 = sphi 0, %s138
    %s162 = sphi 0, %s164
    %s165 = sphi 0, %s162
    %s166 = sphi 0, %s165
    %s182 = sphi 0, %s166
  $region4: #{up_conv3d_forward.1} parent=0 // loop_header_branch
    %15 = sbr.rel (%p13) target = $region8
  $region5: #{up_conv3d_forward.1} parent=0 // loop_body
    %s17 = ssub.s32 %s12, 1
    %s18 = ssub.s32 %s12, 2
    %s25 = sadd.s32 1, %s20
    %p26 = scmp.ge.s32.totalorder %s25, 1
    %s27 = scalar_select %p26, 0, %s25
    %s28 = sadd.s32 1, %s19
    %s29 = scalar_select %p26, %s28, %s19
    %p30 = scmp.ge.s32.totalorder %s29, 2
    %s31 = scalar_select %p30, 0, %s29
    %s32 = ssub.s32 %s19, %s31
    %s33 = ssub.s32 %s20, %s27
    %s34 = sor.u32 %s32, %s33
    %p35 = scmp.eq.s32.totalorder %s34, 0
    %s37 = sadd.s32 %s36, 1
    %s38 = scalar_select %p35, %s36, %s37
    %p41 = pneg %p35
    %p42 = scmp.eq.s32.totalorder %s12, 1
    %p43 = por %p41, %p42
    %p44 = scmp.ne.s32.totalorder %s36, %s39
    %p45 = scmp.eq.s32.totalorder %s12, 0
    %p46 = por %p44, %p45
    %p47 = scmp.ne.s32.totalorder %s36, %s39
    %p48 = scmp.eq.s32.totalorder %s17, 1
    %p49 = por %p47, %p48
    %p50 = scmp.ne.s32.totalorder %s39, %s40
    %p51 = scmp.eq.s32.totalorder %s17, 0
    %p52 = por %p50, %p51
    %p53 = scmp.ne.s32.totalorder %s39, %s40
    %p54 = scmp.eq.s32.totalorder %s18, 1
    %p55 = por %p53, %p54
    %p57 = scmp.ne.s32.totalorder %s40, %s56
    %p58 = scmp.eq.s32.totalorder %s18, 0
    %p59 = por %p57, %p58
    %s61 = sadd.s32 %s60, 1
    %p64 = scmp.eq.s32.totalorder %s12, 1
    %p65 = scmp.ne.s32.totalorder %s60, %s62
    %p66 = scmp.eq.s32.totalorder %s12, 0
    %p67 = por %p65, %p66
    %p68 = scmp.ne.s32.totalorder %s60, %s62
    %p69 = scmp.eq.s32.totalorder %s17, 1
    %p70 = por %p68, %p69
    %p71 = scmp.ne.s32.totalorder %s62, %s63
    %p72 = scmp.eq.s32.totalorder %s17, 0
    %p73 = por %p71, %p72
    %p74 = scmp.ne.s32.totalorder %s62, %s63
    %p75 = scmp.eq.s32.totalorder %s18, 1
    %p76 = por %p74, %p75
    %p78 = scmp.ne.s32.totalorder %s63, %s77
    %p79 = scmp.eq.s32.totalorder %s18, 0
    %p80 = por %p78, %p79
    %s82 = sadd.s32 %s81, 1
    %p85 = scmp.eq.s32.totalorder %s12, 1
    %p86 = scmp.ne.s32.totalorder %s81, %s83
    %p87 = scmp.eq.s32.totalorder %s12, 0
    %p88 = por %p86, %p87
    %p89 = scmp.ne.s32.totalorder %s81, %s83
    %p90 = scmp.eq.s32.totalorder %s17, 1
    %p91 = por %p89, %p90
    %p92 = scmp.ne.s32.totalorder %s83, %s84
    %p93 = scmp.eq.s32.totalorder %s17, 0
    %p94 = por %p92, %p93
    %p95 = scmp.ne.s32.totalorder %s83, %s84
    %p96 = scmp.eq.s32.totalorder %s18, 1
    %p97 = por %p95, %p96
    %p99 = scmp.ne.s32.totalorder %s84, %s98
    %p100 = scmp.eq.s32.totalorder %s18, 0
    %p101 = por %p99, %p100
    %s102 = ssub.s32 %s19, %s31
    %s103 = ssub.s32 %s20, %s27
    %s104 = sor.u32 %s102, %s103
    %p105 = scmp.eq.s32.totalorder %s104, 0
    %s107 = sadd.s32 %s106, 1
    %s108 = scalar_select %p105, %s106, %s107
    %p111 = pneg %p105
    %p112 = scmp.eq.s32.totalorder %s12, 1
    %p113 = por %p111, %p112
    %p114 = scmp.ne.s32.totalorder %s106, %s109
    %p115 = scmp.eq.s32.totalorder %s12, 0
    %p116 = por %p114, %p115
    %p117 = scmp.ne.s32.totalorder %s106, %s109
    %p118 = scmp.eq.s32.totalorder %s17, 1
    %p119 = por %p117, %p118
    %p120 = scmp.ne.s32.totalorder %s109, %s110
    %p121 = scmp.eq.s32.totalorder %s17, 0
    %p122 = por %p120, %p121
    %p123 = scmp.ne.s32.totalorder %s109, %s110
    %p124 = scmp.eq.s32.totalorder %s18, 1
    %p125 = por %p123, %p124
    %p127 = scmp.ne.s32.totalorder %s110, %s126
    %p128 = scmp.eq.s32.totalorder %s18, 0
    %p129 = por %p127, %p128
    %s130 = ssub.s32 %s19, %s31
    %s131 = ssub.s32 %s20, %s27
    %s132 = sor.u32 %s130, %s131
    %p133 = scmp.eq.s32.totalorder %s132, 0
    %s135 = sadd.s32 %s134, 1
    %s136 = scalar_select %p133, %s134, %s135
    %p139 = pneg %p133
    %p140 = scmp.eq.s32.totalorder %s12, 1
    %p141 = por %p139, %p140
    %p142 = scmp.ne.s32.totalorder %s134, %s137
    %p143 = scmp.eq.s32.totalorder %s12, 0
    %p144 = por %p142, %p143
    %p145 = scmp.ne.s32.totalorder %s134, %s137
    %p146 = scmp.eq.s32.totalorder %s17, 1
    %p147 = por %p145, %p146
    %p148 = scmp.ne.s32.totalorder %s137, %s138
    %p149 = scmp.eq.s32.totalorder %s17, 0
    %p150 = por %p148, %p149
    %p151 = scmp.ne.s32.totalorder %s137, %s138
    %p152 = scmp.eq.s32.totalorder %s18, 1
    %p153 = por %p151, %p152
    %p155 = scmp.ne.s32.totalorder %s138, %s154
    %p156 = scmp.eq.s32.totalorder %s18, 0
    %p157 = por %p155, %p156
    %s158 = ssub.s32 %s19, %s31
    %s159 = ssub.s32 %s20, %s27
    %s160 = sor.u32 %s158, %s159
    %p161 = scmp.eq.s32.totalorder %s160, 0
    %s163 = sadd.s32 %s162, 1
    %s164 = scalar_select %p161, %s162, %s163
    %p167 = pneg %p161
    %p168 = scmp.eq.s32.totalorder %s12, 1
    %p169 = por %p167, %p168
    %p170 = scmp.ne.s32.totalorder %s162, %s165
    %p171 = scmp.eq.s32.totalorder %s12, 0
    %p172 = por %p170, %p171
    %p173 = scmp.ne.s32.totalorder %s162, %s165
    %p174 = scmp.eq.s32.totalorder %s17, 1
    %p175 = por %p173, %p174
    %p176 = scmp.ne.s32.totalorder %s165, %s166
    %p177 = scmp.eq.s32.totalorder %s17, 0
    %p178 = por %p176, %p177
    %p179 = scmp.ne.s32.totalorder %s165, %s166
    %p180 = scmp.eq.s32.totalorder %s18, 1
    %p181 = por %p179, %p180
    %p183 = scmp.ne.s32.totalorder %s166, %s182
    %p184 = scmp.eq.s32.totalorder %s18, 0
    %p185 = por %p183, %p184
    %p186 = scmp.le.s32.totalorder 1, %s12
    %p187 = scmp.lt.s32.totalorder %s12, 3
    %p188 = pnand %p186, %p187
    %p189 = pneg %p188
    // Predicated region
    $region9: #{up_conv3d_forward.1} parent=5 // pred_check
      _
    $region10: #{up_conv3d_forward.1} parent=5 // pred_check_branch
      %191 = sbr.rel (%p188) target = $region12
    $region11: #{up_conv3d_forward.1} parent=5 // pred_region
      %s192 = ssub.s32 %s12, 1
      // Predicated region
      $region13: #{up_conv3d_forward.1} parent=11 // pred_check
        %p193 = pneg %p73
      $region14: #{up_conv3d_forward.1} parent=11 // pred_check_branch
        %195 = sbr.rel (%p193) target = $region16
      $region15: #{up_conv3d_forward.1} parent=11 // pred_region
        _
      $region16: #{up_conv3d_forward.1} parent=11 // pred_fallthru
        _
      // Predicated region
      $region17: #{up_conv3d_forward.1} parent=11 // pred_check
        %p196 = pneg %p94
      $region18: #{up_conv3d_forward.1} parent=11 // pred_check_branch
        %198 = sbr.rel (%p196) target = $region20
      $region19: #{up_conv3d_forward.1} parent=11 // pred_region
        _
      $region20: #{up_conv3d_forward.1} parent=11 // pred_fallthru
        _
    $region12: #{up_conv3d_forward.1} parent=5 // pred_fallthru
      _
    %p199 = scmp.lt.s32.totalorder %s12, 2
    // Predicated region
    $region21: #{up_conv3d_forward.1} parent=5 // pred_check
      %p200 = pneg %p199
    $region22: #{up_conv3d_forward.1} parent=5 // pred_check_branch
      %202 = sbr.rel (%p200) target = $region24
    $region23: #{up_conv3d_forward.1} parent=5 // pred_region
      // Predicated region
      $region25: #{up_conv3d_forward.1} parent=23 // pred_check
        %p203 = pneg %p46
      $region26: #{up_conv3d_forward.1} parent=23 // pred_check_branch
        %205 = sbr.rel (%p203) target = $region28
      $region27: #{up_conv3d_forward.1} parent=23 // pred_region
        %s206 = smul.u32 64, %s20
        %p207 = scmp.lt.s32.totalorder %s19, 1
        %s208 = scalar_select %p207, %s19, 1
        %p209 = scmp.lt.s32.totalorder %s206, 63
        %s210 = scalar_select %p209, %s206, 63
        %s211 = smul.addr %s208, 64
        %s212 = sadd.s32 %s210, %s211
        %s213 = smul.addr %s212, 4
        %s214 = scalar_lea.vmem %s0, %s213
        %s215 = smul.u32 64, %s20
      $region28: #{up_conv3d_forward.1} parent=23 // pred_fallthru
        _
    $region24: #{up_conv3d_forward.1} parent=5 // pred_fallthru
      _
    %p216 = scmp.le.s32.totalorder 1, %s12
    %p217 = scmp.lt.s32.totalorder %s12, 3
    %p218 = pnand %p216, %p217
    %p219 = pneg %p218
    // Predicated region
    $region29: #{up_conv3d_forward.1} parent=5 // pred_check
      _
    $region30: #{up_conv3d_forward.1} parent=5 // pred_check_branch
      %221 = sbr.rel (%p218) target = $region32
    $region31: #{up_conv3d_forward.1} parent=5 // pred_region
      %s222 = ssub.s32 %s12, 1
      %s223 = smul.u32 64, %s22
      %p224 = scmp.lt.s32.totalorder %s21, 1
      %s225 = scalar_select %p224, %s21, 1
      %p226 = scmp.lt.s32.totalorder %s223, 63
      %s227 = scalar_select %p226, %s223, 63
      %s228 = smul.addr %s225, 64
      %s229 = sadd.s32 %s227, %s228
      %s230 = smul.addr %s229, 4
      %s231 = scalar_lea.vmem %s0, %s230
      %p232 = pneg %p52
      %p233 = pneg %p49
      %p234 = pneg %p73
      %p235 = pneg %p70
      %p236 = pneg %p94
      %p237 = pneg %p91
      %p238 = pneg %p122
      %p239 = pneg %p119
      %s240 = smul.u32 64, %s22
      %p241 = scmp.lt.s32.totalorder %s21, 1
      %s242 = scalar_select %p241, %s21, 1
      %p243 = scmp.lt.s32.totalorder %s240, 63
      %s244 = scalar_select %p243, %s240, 63
      %s245 = smul.addr %s242, 64
      %s246 = sadd.s32 %s244, %s245
      %s247 = smul.addr %s246, 8
      %s248 = scalar_lea.vmem %s3, %s247
      %p249 = pneg %p150
      %p250 = pneg %p147
      %p251 = scmp.lt.s32.totalorder %s21, 1
      %s252 = scalar_select %p251, %s21, 1
      %p253 = scmp.lt.s32.totalorder %s22, 0
      %s254 = scalar_select %p253, %s22, 0
      %s255 = sadd.s32 %s254, %s252
      %s256 = scalar_lea.vmem %s4, %s255
      %p257 = pneg %p178
      %p258 = pneg %p175
      %p259 = scmp.lt.s32.totalorder %s21, 1
      %s260 = scalar_select %p259, %s21, 1
      %p261 = scmp.lt.s32.totalorder %s22, 0
      %s262 = scalar_select %p261, %s22, 0
      %s263 = sadd.s32 %s262, %s260
      %s264 = scalar_lea.vmem %s5, %s263
      %s265 = smul.u32 64, %s22
      %p266 = scmp.lt.s32.totalorder %s21, 1
      %s267 = scalar_select %p266, %s21, 1
      %p268 = scmp.lt.s32.totalorder %s265, 63
      %s269 = scalar_select %p268, %s265, 63
      %s270 = smul.addr %s267, 64
      %s271 = sadd.s32 %s269, %s270
      %s272 = smul.addr %s271, 4
      %s273 = scalar_lea.vmem %s0, %s272
      %s274 = smul.u32 64, %s22
      %s275 = smul.u32 64, %s22
      %p276 = scmp.lt.s32.totalorder %s21, 1
      %s277 = scalar_select %p276, %s21, 1
      %p278 = scmp.lt.s32.totalorder %s275, 63
      %s279 = scalar_select %p278, %s275, 63
      %s280 = smul.addr %s277, 64
      %s281 = sadd.s32 %s279, %s280
      %s282 = smul.addr %s281, 8
      %s283 = scalar_lea.vmem %s3, %s282
      %s284 = smul.u32 64, %s22
      %p285 = scmp.lt.s32.totalorder %s21, 1
      %s286 = scalar_select %p285, %s21, 1
      %p287 = scmp.lt.s32.totalorder %s22, 0
      %s288 = scalar_select %p287, %s22, 0
      %s289 = sadd.s32 %s288, %s286
      %s290 = scalar_lea.vmem %s4, %s289
      %p291 = scmp.lt.s32.totalorder %s21, 1
      %s292 = scalar_select %p291, %s21, 1
      %p293 = scmp.lt.s32.totalorder %s22, 0
      %s294 = scalar_select %p293, %s22, 0
      %s295 = sadd.s32 %s294, %s292
      %s296 = scalar_lea.vmem %s5, %s295
      %v298 = vld [vmem:[%s273] sm:$0xf]
      %v299 = vld [vmem:[%s273 + $0x4] sm:$0xf]
      %v300 = vld [vmem:[%s273 + $0x8] sm:$0xf]
      %v301 = vld [vmem:[%s273 + $0xc] sm:$0xf]
      %v302 = vld [vmem:[%s273 + $0x10] sm:$0xf]
      %v303 = vld [vmem:[%s273 + $0x14] sm:$0xf]
      %v304 = vld [vmem:[%s273 + $0x18] sm:$0xf]
      %v305 = vld [vmem:[%s273 + $0x1c] sm:$0xf]
      %v306 = vld [vmem:[%s273 + $0x20] sm:$0xf]
      %v307 = vld [vmem:[%s273 + $0x24] sm:$0xf]
      %v308 = vld [vmem:[%s273 + $0x28] sm:$0xf]
      %v309 = vld [vmem:[%s273 + $0x2c] sm:$0xf]
      %v310 = vld [vmem:[%s273 + $0x30] sm:$0xf]
      %v311 = vld [vmem:[%s273 + $0x34] sm:$0xf]
      %v312 = vld [vmem:[%s273 + $0x38] sm:$0xf]
      %v313 = vld [vmem:[%s273 + $0x3c] sm:$0xf]
      %v314 = vld [vmem:[%s273 + $0x40] sm:$0xf]
      %v315 = vld [vmem:[%s273 + $0x44] sm:$0xf]
      %v316 = vld [vmem:[%s273 + $0x48] sm:$0xf]
      %v317 = vld [vmem:[%s273 + $0x4c] sm:$0xf]
      %v318 = vld [vmem:[%s273 + $0x50] sm:$0xf]
      %v319 = vld [vmem:[%s273 + $0x54] sm:$0xf]
      %v320 = vld [vmem:[%s273 + $0x58] sm:$0xf]
      %v321 = vld [vmem:[%s273 + $0x5c] sm:$0xf]
      %v322 = vld [vmem:[%s273 + $0x60] sm:$0xf]
      %v323 = vld [vmem:[%s273 + $0x64] sm:$0xf]
      %v324 = vld [vmem:[%s273 + $0x68] sm:$0xf]
      %v325 = vld [vmem:[%s273 + $0x6c] sm:$0xf]
      %v326 = vld [vmem:[%s273 + $0x70] sm:$0xf]
      %v327 = vld [vmem:[%s273 + $0x74] sm:$0xf]
      %v328 = vld [vmem:[%s273 + $0x78] sm:$0xf]
      %v329 = vld [vmem:[%s273 + $0x7c] sm:$0xf]
      %v330 = vld [vmem:[%s273 + $0x80] sm:$0xf]
      %v331 = vld [vmem:[%s273 + $0x84] sm:$0xf]
      %v332 = vld [vmem:[%s273 + $0x88] sm:$0xf]
      %v333 = vld [vmem:[%s273 + $0x8c] sm:$0xf]
      %v334 = vld [vmem:[%s273 + $0x90] sm:$0xf]
      %v335 = vld [vmem:[%s273 + $0x94] sm:$0xf]
      %v336 = vld [vmem:[%s273 + $0x98] sm:$0xf]
      %v337 = vld [vmem:[%s273 + $0x9c] sm:$0xf]
      %v338 = vld [vmem:[%s273 + $0xa0] sm:$0xf]
      %v339 = vld [vmem:[%s273 + $0xa4] sm:$0xf]
      %v340 = vld [vmem:[%s273 + $0xa8] sm:$0xf]
      %v341 = vld [vmem:[%s273 + $0xac] sm:$0xf]
      %v342 = vld [vmem:[%s273 + $0xb0] sm:$0xf]
      %v343 = vld [vmem:[%s273 + $0xb4] sm:$0xf]
      %v344 = vld [vmem:[%s273 + $0xb8] sm:$0xf]
      %v345 = vld [vmem:[%s273 + $0xbc] sm:$0xf]
      %v346 = vld [vmem:[%s273 + $0xc0] sm:$0xf]
      %v347 = vld [vmem:[%s273 + $0xc4] sm:$0xf]
      %v348 = vld [vmem:[%s273 + $0xc8] sm:$0xf]
      %v349 = vld [vmem:[%s273 + $0xcc] sm:$0xf]
      %v350 = vld [vmem:[%s273 + $0xd0] sm:$0xf]
      %v351 = vld [vmem:[%s273 + $0xd4] sm:$0xf]
      %v352 = vld [vmem:[%s273 + $0xd8] sm:$0xf]
      %v353 = vld [vmem:[%s273 + $0xdc] sm:$0xf]
      %v354 = vld [vmem:[%s273 + $0xe0] sm:$0xf]
      %v355 = vld [vmem:[%s273 + $0xe4] sm:$0xf]
      %v356 = vld [vmem:[%s273 + $0xe8] sm:$0xf]
      %v357 = vld [vmem:[%s273 + $0xec] sm:$0xf]
      %v358 = vld [vmem:[%s273 + $0xf0] sm:$0xf]
      %v359 = vld [vmem:[%s273 + $0xf4] sm:$0xf]
      %v360 = vld [vmem:[%s273 + $0xf8] sm:$0xf]
      %v361 = vld [vmem:[%s273 + $0xfc] sm:$0xf]
      %v362 = vld [vmem:[%s1] sm:$0xf]
      %v363 = vld [vmem:[%s1 + $0x4] sm:$0xf]
      %v364 = vld [vmem:[%s1 + $0x8] sm:$0xf]
      %v365 = vld [vmem:[%s1 + $0xc] sm:$0xf]
      %v366 = vld [vmem:[%s1 + $0x10] sm:$0xf]
      %v367 = vld [vmem:[%s1 + $0x14] sm:$0xf]
      %v368 = vld [vmem:[%s1 + $0x18] sm:$0xf]
      %v369 = vld [vmem:[%s1 + $0x1c] sm:$0xf]
      %v370 = vld [vmem:[%s1 + $0x20] sm:$0xf]
      %v371 = vld [vmem:[%s1 + $0x24] sm:$0xf]
      %v372 = vld [vmem:[%s1 + $0x28] sm:$0xf]
      %v373 = vld [vmem:[%s1 + $0x2c] sm:$0xf]
      %v374 = vld [vmem:[%s1 + $0x30] sm:$0xf]
      %v375 = vld [vmem:[%s1 + $0x34] sm:$0x3]
      %v376 = vld [vmem:[%s2] sm:$0x1]
      %v378 = vlaneseq
      %v379 = vshrl.u32 %v378, 7
      %v380 = vsub.s32 0, %v379
      %v381 = vrot.slane %v376, %v380
      %v447 = vunpack.c.l.b16 %v298
      %v448 = vunpack.c.l.b16 %v299
      %v449 = vunpack.c.l.b16 %v300
      %v450 = vunpack.c.l.b16 %v301
      %v451 = vunpack.c.l.b16 %v302
      %v452 = vunpack.c.l.b16 %v303
      %v453 = vunpack.c.l.b16 %v304
      %v454 = vunpack.c.l.b16 %v305
      %v455 = vunpack.c.l.b16 %v306
      %v456 = vunpack.c.l.b16 %v307
      %v457 = vunpack.c.l.b16 %v308
      %v458 = vunpack.c.l.b16 %v309
      %v459 = vunpack.c.l.b16 %v310
      %v460 = vunpack.c.l.b16 %v311
      %v461 = vunpack.c.l.b16 %v312
      %v462 = vunpack.c.l.b16 %v313
      %v463 = vunpack.c.l.b16 %v314
      %v464 = vunpack.c.l.b16 %v315
      %v465 = vunpack.c.l.b16 %v316
      %v466 = vunpack.c.l.b16 %v317
      %v467 = vunpack.c.l.b16 %v318
      %v468 = vunpack.c.l.b16 %v319
      %v469 = vunpack.c.l.b16 %v320
      %v470 = vunpack.c.l.b16 %v321
      %v471 = vunpack.c.l.b16 %v322
      %v472 = vunpack.c.l.b16 %v323
      %v473 = vunpack.c.l.b16 %v324
      %v474 = vunpack.c.l.b16 %v325
      %v475 = vunpack.c.l.b16 %v326
      %v476 = vunpack.c.l.b16 %v327
      %v477 = vunpack.c.l.b16 %v328
      %v478 = vunpack.c.l.b16 %v329
      %v479 = vunpack.c.l.b16 %v330
      %v480 = vunpack.c.l.b16 %v331
      %v481 = vunpack.c.l.b16 %v332
      %v482 = vunpack.c.l.b16 %v333
      %v483 = vunpack.c.l.b16 %v334
      %v484 = vunpack.c.l.b16 %v335
      %v485 = vunpack.c.l.b16 %v336
      %v486 = vunpack.c.l.b16 %v337
      %v487 = vunpack.c.l.b16 %v338
      %v488 = vunpack.c.l.b16 %v339
      %v489 = vunpack.c.l.b16 %v340
      %v490 = vunpack.c.l.b16 %v341
      %v491 = vunpack.c.l.b16 %v342
      %v492 = vunpack.c.l.b16 %v343
      %v493 = vunpack.c.l.b16 %v344
      %v494 = vunpack.c.l.b16 %v345
      %v495 = vunpack.c.l.b16 %v346
      %v496 = vunpack.c.l.b16 %v347
      %v497 = vunpack.c.l.b16 %v348
      %v498 = vunpack.c.l.b16 %v349
      %v499 = vunpack.c.l.b16 %v350
      %v500 = vunpack.c.l.b16 %v351
      %v501 = vunpack.c.l.b16 %v352
      %v502 = vunpack.c.l.b16 %v353
      %v503 = vunpack.c.l.b16 %v354
      %v504 = vunpack.c.l.b16 %v355
      %v505 = vunpack.c.l.b16 %v356
      %v506 = vunpack.c.l.b16 %v357
      %v507 = vunpack.c.l.b16 %v358
      %v508 = vunpack.c.l.b16 %v359
      %v509 = vunpack.c.l.b16 %v360
      %v510 = vunpack.c.l.b16 %v361
      %v511 = vpack.c.b16 %v448, %v447
      %v512 = vpack.c.b16 %v450, %v449
      %v513 = vpack.c.b16 %v452, %v451
      %v514 = vpack.c.b16 %v454, %v453
      %v515 = vpack.c.b16 %v456, %v455
      %v516 = vpack.c.b16 %v458, %v457
      %v517 = vpack.c.b16 %v460, %v459
      %v518 = vpack.c.b16 %v462, %v461
      %v519 = vpack.c.b16 %v464, %v463
      %v520 = vpack.c.b16 %v466, %v465
      %v521 = vpack.c.b16 %v468, %v467
      %v522 = vpack.c.b16 %v470, %v469
      %v523 = vpack.c.b16 %v472, %v471
      %v524 = vpack.c.b16 %v474, %v473
      %v525 = vpack.c.b16 %v476, %v475
      %v526 = vpack.c.b16 %v478, %v477
      %v527 = vpack.c.b16 %v480, %v479
      %v528 = vpack.c.b16 %v482, %v481
      %v529 = vpack.c.b16 %v484, %v483
      %v530 = vpack.c.b16 %v486, %v485
      %v531 = vpack.c.b16 %v488, %v487
      %v532 = vpack.c.b16 %v490, %v489
      %v533 = vpack.c.b16 %v492, %v491
      %v534 = vpack.c.b16 %v494, %v493
      %v535 = vpack.c.b16 %v496, %v495
      %v536 = vpack.c.b16 %v498, %v497
      %v537 = vpack.c.b16 %v500, %v499
      %v538 = vpack.c.b16 %v502, %v501
      %v539 = vpack.c.b16 %v504, %v503
      %v540 = vpack.c.b16 %v506, %v505
      %v541 = vpack.c.b16 %v508, %v507
      %v542 = vpack.c.b16 %v510, %v509
      %v557 = vunpack.c.l.b16 %v362
      %v558 = vunpack.c.l.b16 %v363
      %v559 = vunpack.c.l.b16 %v364
      %v560 = vunpack.c.l.b16 %v365
      %v561 = vunpack.c.l.b16 %v366
      %v562 = vunpack.c.l.b16 %v367
      %v563 = vunpack.c.l.b16 %v368
      %v564 = vunpack.c.l.b16 %v369
      %v565 = vunpack.c.l.b16 %v370
      %v566 = vunpack.c.l.b16 %v371
      %v567 = vunpack.c.l.b16 %v372
      %v568 = vunpack.c.l.b16 %v373
      %v569 = vunpack.c.l.b16 %v374
      %v570 = vunpack.c.l.b16 %v375
      %v571 = vpack.c.b16 %v558, %v557
      %v572 = vpack.c.b16 %v560, %v559
      %v573 = vpack.c.b16 %v562, %v561
      %v574 = vpack.c.b16 %v564, %v563
      %v575 = vpack.c.b16 %v566, %v565
      %v576 = vpack.c.b16 %v568, %v567
      %v577 = vpack.c.b16 %v570, %v569
      %vm584 = vcmask 883712
      %v586 = vsel %vm584, %v511, 0
      %v589 = vsel %vm584, %v512, 0
      %v592 = vsel %vm584, %v513, 0
      %v595 = vsel %vm584, %v514, 0
      %v598 = vsel %vm584, %v515, 0
      %v601 = vsel %vm584, %v516, 0
      %v604 = vsel %vm584, %v517, 0
      %v607 = vsel %vm584, %v518, 0
      %v610 = vsel %vm584, %v519, 0
      %v613 = vsel %vm584, %v520, 0
      %v616 = vsel %vm584, %v521, 0
      %v619 = vsel %vm584, %v522, 0
      %v622 = vsel %vm584, %v523, 0
      %v625 = vsel %vm584, %v524, 0
      %v628 = vsel %vm584, %v525, 0
      %v631 = vsel %vm584, %v526, 0
      %v634 = vsel %vm584, %v527, 0
      %v637 = vsel %vm584, %v528, 0
      %v640 = vsel %vm584, %v529, 0
      %v643 = vsel %vm584, %v530, 0
      %v646 = vsel %vm584, %v531, 0
      %v649 = vsel %vm584, %v532, 0
      %v652 = vsel %vm584, %v533, 0
      %v655 = vsel %vm584, %v534, 0
      %v658 = vsel %vm584, %v535, 0
      %v661 = vsel %vm584, %v536, 0
      %v664 = vsel %vm584, %v537, 0
      %v667 = vsel %vm584, %v538, 0
      %v670 = vsel %vm584, %v539, 0
      %v673 = vsel %vm584, %v540, 0
      %v676 = vsel %vm584, %v541, 0
      %v679 = vsel %vm584, %v542, 0
      %vm681 = vcmask 1045504
      %v683 = vsel %vm681, %v577, 0
      %685 = vmatprep.subr.bf16.mxu0 0
      %686 = vmatpush1.bf16.msra.mxu0 0
      %687 = vmatprep.subr.bf16.mxu0 0
      %688 = vmatpush1.bf16.msra.mxu0 %v683
      %689 = vmatprep.subr.bf16.mxu0 0
      %690 = vmatpush1.bf16.msra.mxu0 %v576
      %691 = vmatprep.subr.bf16.mxu0 0
      %692 = vmatpush1.bf16.msra.mxu0 %v575
      %693 = vmatprep.subr.bf16.mxu0 0
      %694 = vmatpush1.bf16.msra.mxu0 %v574
      %695 = vmatprep.subr.bf16.mxu0 0
      %696 = vmatpush1.bf16.msra.mxu0 %v573
      %697 = vmatprep.subr.bf16.mxu0 0
      %698 = vmatpush1.bf16.msra.mxu0 %v572
      %699 = vmatprep.subr.bf16.mxu0 0
      %700 = vmatpush1.bf16.msra.mxu0 %v571
      %701 = vmatprep.subr.bf16.mxu0 0
      %702 = vmatpush2.bf16.msra.mxu0 0
      %703 = vmatprep.subr.bf16.mxu0 0
      %704 = vmatpush2.bf16.msra.mxu0 0
      %705 = vmatprep.subr.bf16.mxu0 0
      %706 = vmatpush2.bf16.msra.mxu0 0
      %707 = vmatprep.subr.bf16.mxu0 0
      %708 = vmatpush2.bf16.msra.mxu0 0
      %709 = vmatprep.subr.bf16.mxu0 0
      %710 = vmatpush2.bf16.msra.mxu0 0
      %711 = vmatprep.subr.bf16.mxu0 0
      %712 = vmatpush2.bf16.msra.mxu0 0
      %713 = vmatprep.subr.bf16.mxu0 0
      %714 = vmatpush2.bf16.msra.mxu0 0
      %715 = vmatprep.subr.bf16.mxu0 0
      %716 = vmatpush2.bf16.msra.mxu0 0
      %717 = vmatprep.mubr.bf16.mxu0 0
      %718 = vmatmul.mubr.bf16.gmra.mxu0 %v586
      %v719 = vpop.f32.mrf.mxu0
      %v720 = vadd.f32 %v381, %v719
      %v721 = vpop.f32.mrf.mxu0
      %v722 = vpop.f32.mrf.mxu0
      %v723 = vadd.f32 %v381, %v722
      %v724 = vpop.f32.mrf.mxu0
      %725 = vmatprep.mubr.bf16.mxu0 0
      %726 = vmatmul.mubr.bf16.gmra.mxu0 %v589
      %v727 = vpop.f32.mrf.mxu0
      %v728 = vadd.f32 %v381, %v727
      %v729 = vpop.f32.mrf.mxu0
      %v730 = vpop.f32.mrf.mxu0
      %v731 = vadd.f32 %v381, %v730
      %v732 = vpop.f32.mrf.mxu0
      %733 = vmatprep.mubr.bf16.mxu0 0
      %734 = vmatmul.mubr.bf16.gmra.mxu0 %v592
      %v735 = vpop.f32.mrf.mxu0
      %v736 = vadd.f32 %v381, %v735
      %v737 = vpop.f32.mrf.mxu0
      %v738 = vpop.f32.mrf.mxu0
      %v739 = vadd.f32 %v381, %v738
      %v740 = vpop.f32.mrf.mxu0
      %741 = vmatprep.mubr.bf16.mxu0 0
      %742 = vmatmul.mubr.bf16.gmra.mxu0 %v595
      %v743 = vpop.f32.mrf.mxu0
      %v744 = vadd.f32 %v381, %v743
      %v745 = vpop.f32.mrf.mxu0
      %v746 = vpop.f32.mrf.mxu0
      %v747 = vadd.f32 %v381, %v746
      %v748 = vpop.f32.mrf.mxu0
      %749 = vmatprep.mubr.bf16.mxu0 0
      %750 = vmatmul.mubr.bf16.gmra.mxu0 %v598
      %v751 = vpop.f32.mrf.mxu0
      %v752 = vadd.f32 %v381, %v751
      %v753 = vpop.f32.mrf.mxu0
      %v754 = vpop.f32.mrf.mxu0
      %v755 = vadd.f32 %v381, %v754
      %v756 = vpop.f32.mrf.mxu0
      %757 = vmatprep.mubr.bf16.mxu0 0
      %758 = vmatmul.mubr.bf16.gmra.mxu0 %v601
      %v759 = vpop.f32.mrf.mxu0
      %v760 = vadd.f32 %v381, %v759
      %v761 = vpop.f32.mrf.mxu0
      %v762 = vpop.f32.mrf.mxu0
      %v763 = vadd.f32 %v381, %v762
      %v764 = vpop.f32.mrf.mxu0
      %765 = vmatprep.mubr.bf16.mxu0 0
      %766 = vmatmul.mubr.bf16.gmra.mxu0 %v604
      %v767 = vpop.f32.mrf.mxu0
      %v768 = vadd.f32 %v381, %v767
      %v769 = vpop.f32.mrf.mxu0
      %v770 = vpop.f32.mrf.mxu0
      %v771 = vadd.f32 %v381, %v770
      %v772 = vpop.f32.mrf.mxu0
      %773 = vmatprep.mubr.bf16.mxu0 0
      %774 = vmatmul.mubr.bf16.gmra.mxu0 %v607
      %v775 = vpop.f32.mrf.mxu0
      %v776 = vadd.f32 %v381, %v775
      %v777 = vpop.f32.mrf.mxu0
      %v778 = vpop.f32.mrf.mxu0
      %v779 = vadd.f32 %v381, %v778
      %v780 = vpop.f32.mrf.mxu0
      %781 = vmatprep.mubr.bf16.mxu0 0
      %782 = vmatmul.mubr.bf16.gmra.mxu0 %v610
      %v783 = vpop.f32.mrf.mxu0
      %v784 = vadd.f32 %v381, %v783
      %v785 = vpop.f32.mrf.mxu0
      %v786 = vpop.f32.mrf.mxu0
      %v787 = vadd.f32 %v381, %v786
      %v788 = vpop.f32.mrf.mxu0
      %789 = vmatprep.mubr.bf16.mxu0 0
      %790 = vmatmul.mubr.bf16.gmra.mxu0 %v613
      %v791 = vpop.f32.mrf.mxu0
      %v792 = vadd.f32 %v381, %v791
      %v793 = vpop.f32.mrf.mxu0
      %v794 = vpop.f32.mrf.mxu0
      %v795 = vadd.f32 %v381, %v794
      %v796 = vpop.f32.mrf.mxu0
      %797 = vmatprep.mubr.bf16.mxu0 0
      %798 = vmatmul.mubr.bf16.gmra.mxu0 %v616
      %v799 = vpop.f32.mrf.mxu0
      %v800 = vadd.f32 %v381, %v799
      %v801 = vpop.f32.mrf.mxu0
      %v802 = vpop.f32.mrf.mxu0
      %v803 = vadd.f32 %v381, %v802
      %v804 = vpop.f32.mrf.mxu0
      %805 = vmatprep.mubr.bf16.mxu0 0
      %806 = vmatmul.mubr.bf16.gmra.mxu0 %v619
      %v807 = vpop.f32.mrf.mxu0
      %v808 = vadd.f32 %v381, %v807
      %v809 = vpop.f32.mrf.mxu0
      %v810 = vpop.f32.mrf.mxu0
      %v811 = vadd.f32 %v381, %v810
      %v812 = vpop.f32.mrf.mxu0
      %813 = vmatprep.mubr.bf16.mxu0 0
      %814 = vmatmul.mubr.bf16.gmra.mxu0 %v622
      %v815 = vpop.f32.mrf.mxu0
      %v816 = vadd.f32 %v381, %v815
      %v817 = vpop.f32.mrf.mxu0
      %v818 = vpop.f32.mrf.mxu0
      %v819 = vadd.f32 %v381, %v818
      %v820 = vpop.f32.mrf.mxu0
      %821 = vmatprep.mubr.bf16.mxu0 0
      %822 = vmatmul.mubr.bf16.gmra.mxu0 %v625
      %v823 = vpop.f32.mrf.mxu0
      %v824 = vadd.f32 %v381, %v823
      %v825 = vpop.f32.mrf.mxu0
      %v826 = vpop.f32.mrf.mxu0
      %v827 = vadd.f32 %v381, %v826
      %v828 = vpop.f32.mrf.mxu0
      %829 = vmatprep.mubr.bf16.mxu0 0
      %830 = vmatmul.mubr.bf16.gmra.mxu0 %v628
      %v831 = vpop.f32.mrf.mxu0
      %v832 = vadd.f32 %v381, %v831
      %v833 = vpop.f32.mrf.mxu0
      %v834 = vpop.f32.mrf.mxu0
      %v835 = vadd.f32 %v381, %v834
      %v836 = vpop.f32.mrf.mxu0
      %837 = vmatprep.mubr.bf16.mxu0 0
      %838 = vmatmul.mubr.bf16.gmra.mxu0 %v631
      %v839 = vpop.f32.mrf.mxu0
      %v840 = vadd.f32 %v381, %v839
      %v841 = vpop.f32.mrf.mxu0
      %v842 = vpop.f32.mrf.mxu0
      %v843 = vadd.f32 %v381, %v842
      %v844 = vpop.f32.mrf.mxu0
      %845 = vmatprep.mubr.bf16.mxu0 0
      %846 = vmatmul.mubr.bf16.gmra.mxu0 %v634
      %v847 = vpop.f32.mrf.mxu0
      %v848 = vadd.f32 %v381, %v847
      %v849 = vpop.f32.mrf.mxu0
      %v850 = vpop.f32.mrf.mxu0
      %v851 = vadd.f32 %v381, %v850
      %v852 = vpop.f32.mrf.mxu0
      %853 = vmatprep.mubr.bf16.mxu0 0
      %854 = vmatmul.mubr.bf16.gmra.mxu0 %v637
      %v855 = vpop.f32.mrf.mxu0
      %v856 = vadd.f32 %v381, %v855
      %v857 = vpop.f32.mrf.mxu0
      %v858 = vpop.f32.mrf.mxu0
      %v859 = vadd.f32 %v381, %v858
      %v860 = vpop.f32.mrf.mxu0
      %861 = vmatprep.mubr.bf16.mxu0 0
      %862 = vmatmul.mubr.bf16.gmra.mxu0 %v640
      %v863 = vpop.f32.mrf.mxu0
      %v864 = vadd.f32 %v381, %v863
      %v865 = vpop.f32.mrf.mxu0
      %v866 = vpop.f32.mrf.mxu0
      %v867 = vadd.f32 %v381, %v866
      %v868 = vpop.f32.mrf.mxu0
      %869 = vmatprep.mubr.bf16.mxu0 0
      %870 = vmatmul.mubr.bf16.gmra.mxu0 %v643
      %v871 = vpop.f32.mrf.mxu0
      %v872 = vadd.f32 %v381, %v871
      %v873 = vpop.f32.mrf.mxu0
      %v874 = vpop.f32.mrf.mxu0
      %v875 = vadd.f32 %v381, %v874
      %v876 = vpop.f32.mrf.mxu0
      %877 = vmatprep.mubr.bf16.mxu0 0
      %878 = vmatmul.mubr.bf16.gmra.mxu0 %v646
      %v879 = vpop.f32.mrf.mxu0
      %v880 = vadd.f32 %v381, %v879
      %v881 = vpop.f32.mrf.mxu0
      %v882 = vpop.f32.mrf.mxu0
      %v883 = vadd.f32 %v381, %v882
      %v884 = vpop.f32.mrf.mxu0
      %885 = vmatprep.mubr.bf16.mxu0 0
      %886 = vmatmul.mubr.bf16.gmra.mxu0 %v649
      %v887 = vpop.f32.mrf.mxu0
      %v888 = vadd.f32 %v381, %v887
      %v889 = vpop.f32.mrf.mxu0
      %v890 = vpop.f32.mrf.mxu0
      %v891 = vadd.f32 %v381, %v890
      %v892 = vpop.f32.mrf.mxu0
      %893 = vmatprep.mubr.bf16.mxu0 0
      %894 = vmatmul.mubr.bf16.gmra.mxu0 %v652
      %v895 = vpop.f32.mrf.mxu0
      %v896 = vadd.f32 %v381, %v895
      %v897 = vpop.f32.mrf.mxu0
      %v898 = vpop.f32.mrf.mxu0
      %v899 = vadd.f32 %v381, %v898
      %v900 = vpop.f32.mrf.mxu0
      %901 = vmatprep.mubr.bf16.mxu0 0
      %902 = vmatmul.mubr.bf16.gmra.mxu0 %v655
      %v903 = vpop.f32.mrf.mxu0
      %v904 = vadd.f32 %v381, %v903
      %v905 = vpop.f32.mrf.mxu0
      %v906 = vpop.f32.mrf.mxu0
      %v907 = vadd.f32 %v381, %v906
      %v908 = vpop.f32.mrf.mxu0
      %909 = vmatprep.mubr.bf16.mxu0 0
      %910 = vmatmul.mubr.bf16.gmra.mxu0 %v658
      %v911 = vpop.f32.mrf.mxu0
      %v912 = vadd.f32 %v381, %v911
      %v913 = vpop.f32.mrf.mxu0
      %v914 = vpop.f32.mrf.mxu0
      %v915 = vadd.f32 %v381, %v914
      %v916 = vpop.f32.mrf.mxu0
      %917 = vmatprep.mubr.bf16.mxu0 0
      %918 = vmatmul.mubr.bf16.gmra.mxu0 %v661
      %v919 = vpop.f32.mrf.mxu0
      %v920 = vadd.f32 %v381, %v919
      %v921 = vpop.f32.mrf.mxu0
      %v922 = vpop.f32.mrf.mxu0
      %v923 = vadd.f32 %v381, %v922
      %v924 = vpop.f32.mrf.mxu0
      %925 = vmatprep.mubr.bf16.mxu0 0
      %926 = vmatmul.mubr.bf16.gmra.mxu0 %v664
      %v927 = vpop.f32.mrf.mxu0
      %v928 = vadd.f32 %v381, %v927
      %v929 = vpop.f32.mrf.mxu0
      %v930 = vpop.f32.mrf.mxu0
      %v931 = vadd.f32 %v381, %v930
      %v932 = vpop.f32.mrf.mxu0
      %933 = vmatprep.mubr.bf16.mxu0 0
      %934 = vmatmul.mubr.bf16.gmra.mxu0 %v667
      %v935 = vpop.f32.mrf.mxu0
      %v936 = vadd.f32 %v381, %v935
      %v937 = vpop.f32.mrf.mxu0
      %v938 = vpop.f32.mrf.mxu0
      %v939 = vadd.f32 %v381, %v938
      %v940 = vpop.f32.mrf.mxu0
      %941 = vmatprep.mubr.bf16.mxu0 0
      %942 = vmatmul.mubr.bf16.gmra.mxu0 %v670
      %v943 = vpop.f32.mrf.mxu0
      %v944 = vadd.f32 %v381, %v943
      %v945 = vpop.f32.mrf.mxu0
      %v946 = vpop.f32.mrf.mxu0
      %v947 = vadd.f32 %v381, %v946
      %v948 = vpop.f32.mrf.mxu0
      %949 = vmatprep.mubr.bf16.mxu0 0
      %950 = vmatmul.mubr.bf16.gmra.mxu0 %v673
      %v951 = vpop.f32.mrf.mxu0
      %v952 = vadd.f32 %v381, %v951
      %v953 = vpop.f32.mrf.mxu0
      %v954 = vpop.f32.mrf.mxu0
      %v955 = vadd.f32 %v381, %v954
      %v956 = vpop.f32.mrf.mxu0
      %957 = vmatprep.mubr.bf16.mxu0 0
      %958 = vmatmul.mubr.bf16.gmra.mxu0 %v676
      %v959 = vpop.f32.mrf.mxu0
      %v960 = vadd.f32 %v381, %v959
      %v961 = vpop.f32.mrf.mxu0
      %v962 = vpop.f32.mrf.mxu0
      %v963 = vadd.f32 %v381, %v962
      %v964 = vpop.f32.mrf.mxu0
      %965 = vmatprep.mubr.bf16.mxu0 0
      %966 = vmatmul.mubr.bf16.gmra.mxu0 %v679
      %v967 = vpop.f32.mrf.mxu0
      %v968 = vadd.f32 %v381, %v967
      %v969 = vpop.f32.mrf.mxu0
      %v970 = vpop.f32.mrf.mxu0
      %v971 = vadd.f32 %v381, %v970
      %v972 = vpop.f32.mrf.mxu0
      %973 = vdwg.mxu0
      %vm974 = vcmask 523264
      %975 = vst.msk [vmem:[%s283] sm:$0xff] %vm974, %v720
      %976 = vst.msk [vmem:[%s283 + $0x8] sm:$0xff] %vm974, %v723
      %977 = vst.msk [vmem:[%s283 + $0x10] sm:$0xff] %vm974, %v728
      %978 = vst.msk [vmem:[%s283 + $0x18] sm:$0xff] %vm974, %v731
      %979 = vst.msk [vmem:[%s283 + $0x20] sm:$0xff] %vm974, %v736
      %980 = vst.msk [vmem:[%s283 + $0x28] sm:$0xff] %vm974, %v739
      %981 = vst.msk [vmem:[%s283 + $0x30] sm:$0xff] %vm974, %v744
      %982 = vst.msk [vmem:[%s283 + $0x38] sm:$0xff] %vm974, %v747
      %983 = vst.msk [vmem:[%s283 + $0x40] sm:$0xff] %vm974, %v752
      %984 = vst.msk [vmem:[%s283 + $0x48] sm:$0xff] %vm974, %v755
      %985 = vst.msk [vmem:[%s283 + $0x50] sm:$0xff] %vm974, %v760
      %986 = vst.msk [vmem:[%s283 + $0x58] sm:$0xff] %vm974, %v763
      %987 = vst.msk [vmem:[%s283 + $0x60] sm:$0xff] %vm974, %v768
      %988 = vst.msk [vmem:[%s283 + $0x68] sm:$0xff] %vm974, %v771
      %989 = vst.msk [vmem:[%s283 + $0x70] sm:$0xff] %vm974, %v776
      %990 = vst.msk [vmem:[%s283 + $0x78] sm:$0xff] %vm974, %v779
      %991 = vst.msk [vmem:[%s283 + $0x80] sm:$0xff] %vm974, %v784
      %992 = vst.msk [vmem:[%s283 + $0x88] sm:$0xff] %vm974, %v787
      %993 = vst.msk [vmem:[%s283 + $0x90] sm:$0xff] %vm974, %v792
      %994 = vst.msk [vmem:[%s283 + $0x98] sm:$0xff] %vm974, %v795
      %995 = vst.msk [vmem:[%s283 + $0xa0] sm:$0xff] %vm974, %v800
      %996 = vst.msk [vmem:[%s283 + $0xa8] sm:$0xff] %vm974, %v803
      %997 = vst.msk [vmem:[%s283 + $0xb0] sm:$0xff] %vm974, %v808
      %998 = vst.msk [vmem:[%s283 + $0xb8] sm:$0xff] %vm974, %v811
      %999 = vst.msk [vmem:[%s283 + $0xc0] sm:$0xff] %vm974, %v816
      %1000 = vst.msk [vmem:[%s283 + $0xc8] sm:$0xff] %vm974, %v819
      %1001 = vst.msk [vmem:[%s283 + $0xd0] sm:$0xff] %vm974, %v824
      %1002 = vst.msk [vmem:[%s283 + $0xd8] sm:$0xff] %vm974, %v827
      %1003 = vst.msk [vmem:[%s283 + $0xe0] sm:$0xff] %vm974, %v832
      %1004 = vst.msk [vmem:[%s283 + $0xe8] sm:$0xff] %vm974, %v835
      %1005 = vst.msk [vmem:[%s283 + $0xf0] sm:$0xff] %vm974, %v840
      %1006 = vst.msk [vmem:[%s283 + $0xf8] sm:$0xff] %vm974, %v843
      %1007 = vst.msk [vmem:[%s283 + $0x100] sm:$0xff] %vm974, %v848
      %1008 = vst.msk [vmem:[%s283 + $0x108] sm:$0xff] %vm974, %v851
      %1009 = vst.msk [vmem:[%s283 + $0x110] sm:$0xff] %vm974, %v856
      %1010 = vst.msk [vmem:[%s283 + $0x118] sm:$0xff] %vm974, %v859
      %1011 = vst.msk [vmem:[%s283 + $0x120] sm:$0xff] %vm974, %v864
      %1012 = vst.msk [vmem:[%s283 + $0x128] sm:$0xff] %vm974, %v867
      %1013 = vst.msk [vmem:[%s283 + $0x130] sm:$0xff] %vm974, %v872
      %1014 = vst.msk [vmem:[%s283 + $0x138] sm:$0xff] %vm974, %v875
      %1015 = vst.msk [vmem:[%s283 + $0x140] sm:$0xff] %vm974, %v880
      %1016 = vst.msk [vmem:[%s283 + $0x148] sm:$0xff] %vm974, %v883
      %1017 = vst.msk [vmem:[%s283 + $0x150] sm:$0xff] %vm974, %v888
      %1018 = vst.msk [vmem:[%s283 + $0x158] sm:$0xff] %vm974, %v891
      %1019 = vst.msk [vmem:[%s283 + $0x160] sm:$0xff] %vm974, %v896
      %1020 = vst.msk [vmem:[%s283 + $0x168] sm:$0xff] %vm974, %v899
      %1021 = vst.msk [vmem:[%s283 + $0x170] sm:$0xff] %vm974, %v904
      %1022 = vst.msk [vmem:[%s283 + $0x178] sm:$0xff] %vm974, %v907
      %1023 = vst.msk [vmem:[%s283 + $0x180] sm:$0xff] %vm974, %v912
      %1024 = vst.msk [vmem:[%s283 + $0x188] sm:$0xff] %vm974, %v915
      %1025 = vst.msk [vmem:[%s283 + $0x190] sm:$0xff] %vm974, %v920
      %1026 = vst.msk [vmem:[%s283 + $0x198] sm:$0xff] %vm974, %v923
      %1027 = vst.msk [vmem:[%s283 + $0x1a0] sm:$0xff] %vm974, %v928
      %1028 = vst.msk [vmem:[%s283 + $0x1a8] sm:$0xff] %vm974, %v931
      %1029 = vst.msk [vmem:[%s283 + $0x1b0] sm:$0xff] %vm974, %v936
      %1030 = vst.msk [vmem:[%s283 + $0x1b8] sm:$0xff] %vm974, %v939
      %1031 = vst.msk [vmem:[%s283 + $0x1c0] sm:$0xff] %vm974, %v944
      %1032 = vst.msk [vmem:[%s283 + $0x1c8] sm:$0xff] %vm974, %v947
      %1033 = vst.msk [vmem:[%s283 + $0x1d0] sm:$0xff] %vm974, %v952
      %1034 = vst.msk [vmem:[%s283 + $0x1d8] sm:$0xff] %vm974, %v955
      %1035 = vst.msk [vmem:[%s283 + $0x1e0] sm:$0xff] %vm974, %v960
      %1036 = vst.msk [vmem:[%s283 + $0x1e8] sm:$0xff] %vm974, %v963
      %1037 = vst.msk [vmem:[%s283 + $0x1f0] sm:$0xff] %vm974, %v968
      %1038 = vst.msk [vmem:[%s283 + $0x1f8] sm:$0xff] %vm974, %v971
      %v1039 = vsel %vm974, %v720, 0.0
      %v1040 = vsel %vm974, %v723, 0.0
      %v1041 = vadd.f32 %v1039, %v1040
      %v1042 = vsel %vm974, %v728, 0.0
      %v1043 = vadd.f32 %v1041, %v1042
      %v1044 = vsel %vm974, %v731, 0.0
      %v1045 = vadd.f32 %v1043, %v1044
      %v1046 = vsel %vm974, %v736, 0.0
      %v1047 = vadd.f32 %v1045, %v1046
      %v1048 = vsel %vm974, %v739, 0.0
      %v1049 = vadd.f32 %v1047, %v1048
      %v1050 = vsel %vm974, %v744, 0.0
      %v1051 = vadd.f32 %v1049, %v1050
      %v1052 = vsel %vm974, %v747, 0.0
      %v1053 = vadd.f32 %v1051, %v1052
      %v1054 = vsel %vm974, %v752, 0.0
      %v1055 = vadd.f32 %v1053, %v1054
      %v1056 = vsel %vm974, %v755, 0.0
      %v1057 = vadd.f32 %v1055, %v1056
      %v1058 = vsel %vm974, %v760, 0.0
      %v1059 = vadd.f32 %v1057, %v1058
      %v1060 = vsel %vm974, %v763, 0.0
      %v1061 = vadd.f32 %v1059, %v1060
      %v1062 = vsel %vm974, %v768, 0.0
      %v1063 = vadd.f32 %v1061, %v1062
      %v1064 = vsel %vm974, %v771, 0.0
      %v1065 = vadd.f32 %v1063, %v1064
      %v1066 = vsel %vm974, %v776, 0.0
      %v1067 = vadd.f32 %v1065, %v1066
      %v1068 = vsel %vm974, %v779, 0.0
      %v1069 = vadd.f32 %v1067, %v1068
      %v1070 = vsel %vm974, %v784, 0.0
      %v1071 = vadd.f32 %v1069, %v1070
      %v1072 = vsel %vm974, %v787, 0.0
      %v1073 = vadd.f32 %v1071, %v1072
      %v1074 = vsel %vm974, %v792, 0.0
      %v1075 = vadd.f32 %v1073, %v1074
      %v1076 = vsel %vm974, %v795, 0.0
      %v1077 = vadd.f32 %v1075, %v1076
      %v1078 = vsel %vm974, %v800, 0.0
      %v1079 = vadd.f32 %v1077, %v1078
      %v1080 = vsel %vm974, %v803, 0.0
      %v1081 = vadd.f32 %v1079, %v1080
      %v1082 = vsel %vm974, %v808, 0.0
      %v1083 = vadd.f32 %v1081, %v1082
      %v1084 = vsel %vm974, %v811, 0.0
      %v1085 = vadd.f32 %v1083, %v1084
      %v1086 = vsel %vm974, %v816, 0.0
      %v1087 = vadd.f32 %v1085, %v1086
      %v1088 = vsel %vm974, %v819, 0.0
      %v1089 = vadd.f32 %v1087, %v1088
      %v1090 = vsel %vm974, %v824, 0.0
      %v1091 = vadd.f32 %v1089, %v1090
      %v1092 = vsel %vm974, %v827, 0.0
      %v1093 = vadd.f32 %v1091, %v1092
      %v1094 = vsel %vm974, %v832, 0.0
      %v1095 = vadd.f32 %v1093, %v1094
      %v1096 = vsel %vm974, %v835, 0.0
      %v1097 = vadd.f32 %v1095, %v1096
      %v1098 = vsel %vm974, %v840, 0.0
      %v1099 = vadd.f32 %v1097, %v1098
      %v1100 = vsel %vm974, %v843, 0.0
      %v1101 = vadd.f32 %v1099, %v1100
      %v1102 = vsel %vm974, %v848, 0.0
      %v1103 = vadd.f32 %v1101, %v1102
      %v1104 = vsel %vm974, %v851, 0.0
      %v1105 = vadd.f32 %v1103, %v1104
      %v1106 = vsel %vm974, %v856, 0.0
      %v1107 = vadd.f32 %v1105, %v1106
      %v1108 = vsel %vm974, %v859, 0.0
      %v1109 = vadd.f32 %v1107, %v1108
      %v1110 = vsel %vm974, %v864, 0.0
      %v1111 = vadd.f32 %v1109, %v1110
      %v1112 = vsel %vm974, %v867, 0.0
      %v1113 = vadd.f32 %v1111, %v1112
      %v1114 = vsel %vm974, %v872, 0.0
      %v1115 = vadd.f32 %v1113, %v1114
      %v1116 = vsel %vm974, %v875, 0.0
      %v1117 = vadd.f32 %v1115, %v1116
      %v1118 = vsel %vm974, %v880, 0.0
      %v1119 = vadd.f32 %v1117, %v1118
      %v1120 = vsel %vm974, %v883, 0.0
      %v1121 = vadd.f32 %v1119, %v1120
      %v1122 = vsel %vm974, %v888, 0.0
      %v1123 = vadd.f32 %v1121, %v1122
      %v1124 = vsel %vm974, %v891, 0.0
      %v1125 = vadd.f32 %v1123, %v1124
      %v1126 = vsel %vm974, %v896, 0.0
      %v1127 = vadd.f32 %v1125, %v1126
      %v1128 = vsel %vm974, %v899, 0.0
      %v1129 = vadd.f32 %v1127, %v1128
      %v1130 = vsel %vm974, %v904, 0.0
      %v1131 = vadd.f32 %v1129, %v1130
      %v1132 = vsel %vm974, %v907, 0.0
      %v1133 = vadd.f32 %v1131, %v1132
      %v1134 = vsel %vm974, %v912, 0.0
      %v1135 = vadd.f32 %v1133, %v1134
      %v1136 = vsel %vm974, %v915, 0.0
      %v1137 = vadd.f32 %v1135, %v1136
      %v1138 = vsel %vm974, %v920, 0.0
      %v1139 = vadd.f32 %v1137, %v1138
      %v1140 = vsel %vm974, %v923, 0.0
      %v1141 = vadd.f32 %v1139, %v1140
      %v1142 = vsel %vm974, %v928, 0.0
      %v1143 = vadd.f32 %v1141, %v1142
      %v1144 = vsel %vm974, %v931, 0.0
      %v1145 = vadd.f32 %v1143, %v1144
      %v1146 = vsel %vm974, %v936, 0.0
      %v1147 = vadd.f32 %v1145, %v1146
      %v1148 = vsel %vm974, %v939, 0.0
      %v1149 = vadd.f32 %v1147, %v1148
      %v1150 = vsel %vm974, %v944, 0.0
      %v1151 = vadd.f32 %v1149, %v1150
      %v1152 = vsel %vm974, %v947, 0.0
      %v1153 = vadd.f32 %v1151, %v1152
      %v1154 = vsel %vm974, %v952, 0.0
      %v1155 = vadd.f32 %v1153, %v1154
      %v1156 = vsel %vm974, %v955, 0.0
      %v1157 = vadd.f32 %v1155, %v1156
      %v1158 = vsel %vm974, %v960, 0.0
      %v1159 = vadd.f32 %v1157, %v1158
      %v1160 = vsel %vm974, %v963, 0.0
      %v1161 = vadd.f32 %v1159, %v1160
      %v1162 = vsel %vm974, %v968, 0.0
      %v1163 = vadd.f32 %v1161, %v1162
      %v1164 = vsel %vm974, %v971, 0.0
      %v1165 = vadd.f32 %v1163, %v1164
      %v1166 = vrot.slane %v1165, 4
      %v1167 = vadd.f32 %v1165, %v1166
      %v1168 = vrot.slane %v1167, 2
      %v1169 = vadd.f32 %v1167, %v1168
      %v1170 = vrot.slane %v1169, 1
      %v1171 = vadd.f32 %v1169, %v1170
      %vm1172 = vcmask 516096
      %1173 = vst.msk [vmem:[%s290] sm:$0x1] %vm1172, %v1171
      %v1174 = vmul.f32 %v720, %v720
      %v1175 = vmul.f32 %v723, %v723
      %v1176 = vmul.f32 %v728, %v728
      %v1177 = vmul.f32 %v731, %v731
      %v1178 = vmul.f32 %v736, %v736
      %v1179 = vmul.f32 %v739, %v739
      %v1180 = vmul.f32 %v744, %v744
      %v1181 = vmul.f32 %v747, %v747
      %v1182 = vmul.f32 %v752, %v752
      %v1183 = vmul.f32 %v755, %v755
      %v1184 = vmul.f32 %v760, %v760
      %v1185 = vmul.f32 %v763, %v763
      %v1186 = vmul.f32 %v768, %v768
      %v1187 = vmul.f32 %v771, %v771
      %v1188 = vmul.f32 %v776, %v776
      %v1189 = vmul.f32 %v779, %v779
      %v1190 = vmul.f32 %v784, %v784
      %v1191 = vmul.f32 %v787, %v787
      %v1192 = vmul.f32 %v792, %v792
      %v1193 = vmul.f32 %v795, %v795
      %v1194 = vmul.f32 %v800, %v800
      %v1195 = vmul.f32 %v803, %v803
      %v1196 = vmul.f32 %v808, %v808
      %v1197 = vmul.f32 %v811, %v811
      %v1198 = vmul.f32 %v816, %v816
      %v1199 = vmul.f32 %v819, %v819
      %v1200 = vmul.f32 %v824, %v824
      %v1201 = vmul.f32 %v827, %v827
      %v1202 = vmul.f32 %v832, %v832
      %v1203 = vmul.f32 %v835, %v835
      %v1204 = vmul.f32 %v840, %v840
      %v1205 = vmul.f32 %v843, %v843
      %v1206 = vmul.f32 %v848, %v848
      %v1207 = vmul.f32 %v851, %v851
      %v1208 = vmul.f32 %v856, %v856
      %v1209 = vmul.f32 %v859, %v859
      %v1210 = vmul.f32 %v864, %v864
      %v1211 = vmul.f32 %v867, %v867
      %v1212 = vmul.f32 %v872, %v872
      %v1213 = vmul.f32 %v875, %v875
      %v1214 = vmul.f32 %v880, %v880
      %v1215 = vmul.f32 %v883, %v883
      %v1216 = vmul.f32 %v888, %v888
      %v1217 = vmul.f32 %v891, %v891
      %v1218 = vmul.f32 %v896, %v896
      %v1219 = vmul.f32 %v899, %v899
      %v1220 = vmul.f32 %v904, %v904
      %v1221 = vmul.f32 %v907, %v907
      %v1222 = vmul.f32 %v912, %v912
      %v1223 = vmul.f32 %v915, %v915
      %v1224 = vmul.f32 %v920, %v920
      %v1225 = vmul.f32 %v923, %v923
      %v1226 = vmul.f32 %v928, %v928
      %v1227 = vmul.f32 %v931, %v931
      %v1228 = vmul.f32 %v936, %v936
      %v1229 = vmul.f32 %v939, %v939
      %v1230 = vmul.f32 %v944, %v944
      %v1231 = vmul.f32 %v947, %v947
      %v1232 = vmul.f32 %v952, %v952
      %v1233 = vmul.f32 %v955, %v955
      %v1234 = vmul.f32 %v960, %v960
      %v1235 = vmul.f32 %v963, %v963
      %v1236 = vmul.f32 %v968, %v968
      %v1237 = vmul.f32 %v971, %v971
      %v1238 = vsel %vm974, %v1174, 0.0
      %v1239 = vsel %vm974, %v1175, 0.0
      %v1240 = vadd.f32 %v1238, %v1239
      %v1241 = vsel %vm974, %v1176, 0.0
      %v1242 = vadd.f32 %v1240, %v1241
      %v1243 = vsel %vm974, %v1177, 0.0
      %v1244 = vadd.f32 %v1242, %v1243
      %v1245 = vsel %vm974, %v1178, 0.0
      %v1246 = vadd.f32 %v1244, %v1245
      %v1247 = vsel %vm974, %v1179, 0.0
      %v1248 = vadd.f32 %v1246, %v1247
      %v1249 = vsel %vm974, %v1180, 0.0
      %v1250 = vadd.f32 %v1248, %v1249
      %v1251 = vsel %vm974, %v1181, 0.0
      %v1252 = vadd.f32 %v1250, %v1251
      %v1253 = vsel %vm974, %v1182, 0.0
      %v1254 = vadd.f32 %v1252, %v1253
      %v1255 = vsel %vm974, %v1183, 0.0
      %v1256 = vadd.f32 %v1254, %v1255
      %v1257 = vsel %vm974, %v1184, 0.0
      %v1258 = vadd.f32 %v1256, %v1257
      %v1259 = vsel %vm974, %v1185, 0.0
      %v1260 = vadd.f32 %v1258, %v1259
      %v1261 = vsel %vm974, %v1186, 0.0
      %v1262 = vadd.f32 %v1260, %v1261
      %v1263 = vsel %vm974, %v1187, 0.0
      %v1264 = vadd.f32 %v1262, %v1263
      %v1265 = vsel %vm974, %v1188, 0.0
      %v1266 = vadd.f32 %v1264, %v1265
      %v1267 = vsel %vm974, %v1189, 0.0
      %v1268 = vadd.f32 %v1266, %v1267
      %v1269 = vsel %vm974, %v1190, 0.0
      %v1270 = vadd.f32 %v1268, %v1269
      %v1271 = vsel %vm974, %v1191, 0.0
      %v1272 = vadd.f32 %v1270, %v1271
      %v1273 = vsel %vm974, %v1192, 0.0
      %v1274 = vadd.f32 %v1272, %v1273
      %v1275 = vsel %vm974, %v1193, 0.0
      %v1276 = vadd.f32 %v1274, %v1275
      %v1277 = vsel %vm974, %v1194, 0.0
      %v1278 = vadd.f32 %v1276, %v1277
      %v1279 = vsel %vm974, %v1195, 0.0
      %v1280 = vadd.f32 %v1278, %v1279
      %v1281 = vsel %vm974, %v1196, 0.0
      %v1282 = vadd.f32 %v1280, %v1281
      %v1283 = vsel %vm974, %v1197, 0.0
      %v1284 = vadd.f32 %v1282, %v1283
      %v1285 = vsel %vm974, %v1198, 0.0
      %v1286 = vadd.f32 %v1284, %v1285
      %v1287 = vsel %vm974, %v1199, 0.0
      %v1288 = vadd.f32 %v1286, %v1287
      %v1289 = vsel %vm974, %v1200, 0.0
      %v1290 = vadd.f32 %v1288, %v1289
      %v1291 = vsel %vm974, %v1201, 0.0
      %v1292 = vadd.f32 %v1290, %v1291
      %v1293 = vsel %vm974, %v1202, 0.0
      %v1294 = vadd.f32 %v1292, %v1293
      %v1295 = vsel %vm974, %v1203, 0.0
      %v1296 = vadd.f32 %v1294, %v1295
      %v1297 = vsel %vm974, %v1204, 0.0
      %v1298 = vadd.f32 %v1296, %v1297
      %v1299 = vsel %vm974, %v1205, 0.0
      %v1300 = vadd.f32 %v1298, %v1299
      %v1301 = vsel %vm974, %v1206, 0.0
      %v1302 = vadd.f32 %v1300, %v1301
      %v1303 = vsel %vm974, %v1207, 0.0
      %v1304 = vadd.f32 %v1302, %v1303
      %v1305 = vsel %vm974, %v1208, 0.0
      %v1306 = vadd.f32 %v1304, %v1305
      %v1307 = vsel %vm974, %v1209, 0.0
      %v1308 = vadd.f32 %v1306, %v1307
      %v1309 = vsel %vm974, %v1210, 0.0
      %v1310 = vadd.f32 %v1308, %v1309
      %v1311 = vsel %vm974, %v1211, 0.0
      %v1312 = vadd.f32 %v1310, %v1311
      %v1313 = vsel %vm974, %v1212, 0.0
      %v1314 = vadd.f32 %v1312, %v1313
      %v1315 = vsel %vm974, %v1213, 0.0
      %v1316 = vadd.f32 %v1314, %v1315
      %v1317 = vsel %vm974, %v1214, 0.0
      %v1318 = vadd.f32 %v1316, %v1317
      %v1319 = vsel %vm974, %v1215, 0.0
      %v1320 = vadd.f32 %v1318, %v1319
      %v1321 = vsel %vm974, %v1216, 0.0
      %v1322 = vadd.f32 %v1320, %v1321
      %v1323 = vsel %vm974, %v1217, 0.0
      %v1324 = vadd.f32 %v1322, %v1323
      %v1325 = vsel %vm974, %v1218, 0.0
      %v1326 = vadd.f32 %v1324, %v1325
      %v1327 = vsel %vm974, %v1219, 0.0
      %v1328 = vadd.f32 %v1326, %v1327
      %v1329 = vsel %vm974, %v1220, 0.0
      %v1330 = vadd.f32 %v1328, %v1329
      %v1331 = vsel %vm974, %v1221, 0.0
      %v1332 = vadd.f32 %v1330, %v1331
      %v1333 = vsel %vm974, %v1222, 0.0
      %v1334 = vadd.f32 %v1332, %v1333
      %v1335 = vsel %vm974, %v1223, 0.0
      %v1336 = vadd.f32 %v1334, %v1335
      %v1337 = vsel %vm974, %v1224, 0.0
      %v1338 = vadd.f32 %v1336, %v1337
      %v1339 = vsel %vm974, %v1225, 0.0
      %v1340 = vadd.f32 %v1338, %v1339
      %v1341 = vsel %vm974, %v1226, 0.0
      %v1342 = vadd.f32 %v1340, %v1341
      %v1343 = vsel %vm974, %v1227, 0.0
      %v1344 = vadd.f32 %v1342, %v1343
      %v1345 = vsel %vm974, %v1228, 0.0
      %v1346 = vadd.f32 %v1344, %v1345
      %v1347 = vsel %vm974, %v1229, 0.0
      %v1348 = vadd.f32 %v1346, %v1347
      %v1349 = vsel %vm974, %v1230, 0.0
      %v1350 = vadd.f32 %v1348, %v1349
      %v1351 = vsel %vm974, %v1231, 0.0
      %v1352 = vadd.f32 %v1350, %v1351
      %v1353 = vsel %vm974, %v1232, 0.0
      %v1354 = vadd.f32 %v1352, %v1353
      %v1355 = vsel %vm974, %v1233, 0.0
      %v1356 = vadd.f32 %v1354, %v1355
      %v1357 = vsel %vm974, %v1234, 0.0
      %v1358 = vadd.f32 %v1356, %v1357
      %v1359 = vsel %vm974, %v1235, 0.0
      %v1360 = vadd.f32 %v1358, %v1359
      %v1361 = vsel %vm974, %v1236, 0.0
      %v1362 = vadd.f32 %v1360, %v1361
      %v1363 = vsel %vm974, %v1237, 0.0
      %v1364 = vadd.f32 %v1362, %v1363
      %v1365 = vrot.slane %v1364, 4
      %v1366 = vadd.f32 %v1364, %v1365
      %v1367 = vrot.slane %v1366, 2
      %v1368 = vadd.f32 %v1366, %v1367
      %v1369 = vrot.slane %v1368, 1
      %v1370 = vadd.f32 %v1368, %v1369
      %1371 = vst.msk [vmem:[%s296] sm:$0x1] %vm1172, %v1370
      %s1372 = smul.u32 64, %s22
      %p1373 = scmp.lt.s32.totalorder %s21, 1
      %s1374 = scalar_select %p1373, %s21, 1
      %p1375 = scmp.lt.s32.totalorder %s1372, 63
      %s1376 = scalar_select %p1375, %s1372, 63
      %s1377 = smul.addr %s1374, 64
      %s1378 = sadd.s32 %s1376, %s1377
      %s1379 = smul.addr %s1378, 8
      %s1380 = scalar_lea.vmem %s3, %s1379
      %p1381 = scmp.lt.s32.totalorder %s21, 1
      %s1382 = scalar_select %p1381, %s21, 1
      %p1383 = scmp.lt.s32.totalorder %s22, 0
      %s1384 = scalar_select %p1383, %s22, 0
      %s1385 = sadd.s32 %s1384, %s1382
      %s1386 = scalar_lea.vmem %s4, %s1385
      %p1387 = scmp.lt.s32.totalorder %s21, 1
      %s1388 = scalar_select %p1387, %s21, 1
      %p1389 = scmp.lt.s32.totalorder %s22, 0
      %s1390 = scalar_select %p1389, %s22, 0
      %s1391 = sadd.s32 %s1390, %s1388
      %s1392 = scalar_lea.vmem %s5, %s1391
      // Predicated region
      $region33: #{up_conv3d_forward.1} parent=31 // pred_check
        %p1393 = pneg %p119
      $region34: #{up_conv3d_forward.1} parent=31 // pred_check_branch
        %1395 = sbr.rel (%p1393) target = $region36
      $region35: #{up_conv3d_forward.1} parent=31 // pred_region
        %s1396 = smul.u32 64, %s22
      $region36: #{up_conv3d_forward.1} parent=31 // pred_fallthru
        _
      // Predicated region
      $region37: #{up_conv3d_forward.1} parent=31 // pred_check
        %p1397 = pneg %p147
      $region38: #{up_conv3d_forward.1} parent=31 // pred_check_branch
        %1399 = sbr.rel (%p1397) target = $region40
      $region39: #{up_conv3d_forward.1} parent=31 // pred_region
        _
      $region40: #{up_conv3d_forward.1} parent=31 // pred_fallthru
        _
      // Predicated region
      $region41: #{up_conv3d_forward.1} parent=31 // pred_check
        %p1400 = pneg %p175
      $region42: #{up_conv3d_forward.1} parent=31 // pred_check_branch
        %1402 = sbr.rel (%p1400) target = $region44
      $region43: #{up_conv3d_forward.1} parent=31 // pred_region
        _
      $region44: #{up_conv3d_forward.1} parent=31 // pred_fallthru
        _
    $region32: #{up_conv3d_forward.1} parent=5 // pred_fallthru
      _
    %p1403 = scmp.le.s32.totalorder 2, %s12
    // Predicated region
    $region45: #{up_conv3d_forward.1} parent=5 // pred_check
      %p1404 = pneg %p1403
    $region46: #{up_conv3d_forward.1} parent=5 // pred_check_branch
      %1406 = sbr.rel (%p1404) target = $region48
    $region47: #{up_conv3d_forward.1} parent=5 // pred_region
      %s1407 = ssub.s32 %s12, 2
      // Predicated region
      $region49: #{up_conv3d_forward.1} parent=47 // pred_check
        %p1408 = pneg %p125
      $region50: #{up_conv3d_forward.1} parent=47 // pred_check_branch
        %1410 = sbr.rel (%p1408) target = $region52
      $region51: #{up_conv3d_forward.1} parent=47 // pred_region
        %s1411 = smul.u32 64, %s24
        %p1412 = scmp.lt.s32.totalorder %s23, 1
        %s1413 = scalar_select %p1412, %s23, 1
        %p1414 = scmp.lt.s32.totalorder %s1411, 63
        %s1415 = scalar_select %p1414, %s1411, 63
        %s1416 = smul.addr %s1413, 64
        %s1417 = sadd.s32 %s1415, %s1416
        %s1418 = smul.addr %s1417, 8
        %s1419 = scalar_lea.vmem %s3, %s1418
      $region52: #{up_conv3d_forward.1} parent=47 // pred_fallthru
        _
      // Predicated region
      $region53: #{up_conv3d_forward.1} parent=47 // pred_check
        %p1420 = pneg %p153
      $region54: #{up_conv3d_forward.1} parent=47 // pred_check_branch
        %1422 = sbr.rel (%p1420) target = $region56
      $region55: #{up_conv3d_forward.1} parent=47 // pred_region
        %p1423 = scmp.lt.s32.totalorder %s23, 1
        %s1424 = scalar_select %p1423, %s23, 1
        %p1425 = scmp.lt.s32.totalorder %s24, 0
        %s1426 = scalar_select %p1425, %s24, 0
        %s1427 = sadd.s32 %s1426, %s1424
        %s1428 = scalar_lea.vmem %s4, %s1427
      $region56: #{up_conv3d_forward.1} parent=47 // pred_fallthru
        _
      // Predicated region
      $region57: #{up_conv3d_forward.1} parent=47 // pred_check
        %p1429 = pneg %p181
      $region58: #{up_conv3d_forward.1} parent=47 // pred_check_branch
        %1431 = sbr.rel (%p1429) target = $region60
      $region59: #{up_conv3d_forward.1} parent=47 // pred_region
        %p1432 = scmp.lt.s32.totalorder %s23, 1
        %s1433 = scalar_select %p1432, %s23, 1
        %p1434 = scmp.lt.s32.totalorder %s24, 0
        %s1435 = scalar_select %p1434, %s24, 0
        %s1436 = sadd.s32 %s1435, %s1433
        %s1437 = scalar_lea.vmem %s5, %s1436
      $region60: #{up_conv3d_forward.1} parent=47 // pred_fallthru
        _
    $region48: #{up_conv3d_forward.1} parent=5 // pred_fallthru
      _
  $region6: #{up_conv3d_forward.1} parent=0 // loop_footer
    %s16 = sadd.s32 1, %s12
  $region7: #{up_conv3d_forward.1} parent=0 // loop_footer_branch
    %11 = sbr.rel target = $region3
  $region8: #{up_conv3d_forward.1} parent=0 // loop_exit
    _

</llo_original>
